<compile_context>
chip_gen: v7x
topology: tpu7x:2x2x1
jax: 0.10.0
libtpu: 0.0.40
codegen_flags: <defaults>
</compile_context>

<pallas_src>
import jax
import jax.numpy as jnp
from jax.experimental import pallas as pl
from jax.experimental.pallas import tpu as pltpu


def _round_up(x, m):
    return (x + m - 1) // m * m


def _vmem_budget_bytes():
    """~3/4 of physical VMEM (capped), falling back to a v7x-safe 48 MiB."""
    phys = 64 * 1024 * 1024
    try:
        info = pltpu.get_tpu_info()
        phys = int(getattr(info, "vmem_capacity_bytes", phys))
    except Exception:
        pass
    return min(phys * 3 // 4, 100 * 1024 * 1024)


def _pick_tiles(M, K, Co_pad, in_bytes, budget):
    TCo = 256 if Co_pad % 256 == 0 else 128
    K_pad = _round_up(K, 128)
    TK = K_pad
    if K_pad > 1024:                       # tile the contraction so big Ci fits VMEM
        for cand in (1024, 512, 256, 128):
            if K_pad % cand == 0:
                TK = cand
                break
    TM = 8
    m_cap = max(_round_up(M, 8), 8)
    for cand in (2048, 1024, 512, 256, 128, 64, 32, 16, 8):
        need = (2 * (cand * TK + TK * TCo) * in_bytes   # double-buffered MXU inputs
                + 2 * cand * TCo * 2                    # bf16 conv-out tile (dbl-buf)
                + cand * TCo * 4                        # f32 accumulator scratch
                + 64 * 1024)
        if cand <= m_cap and need <= budget:
            TM = cand
            break
    return TM, TK, TCo, K_pad


# --------- pass 1: K-tiled conv matmul + per-M-tile BN partial statistics ---------

def _conv_stats_kernel(p_ref, w_ref, conv_ref, stats_ref, acc_ref):
    # p_ref    : (TM, TK)   im2col patch tile (source dtype)
    # w_ref    : (TK, TCo)  folded 3x3 conv weight tile (source dtype)
    # conv_ref : (TM, TCo)  conv output tile, bf16 (HBM round-trip for pass 2)
    # stats_ref: (2, TCo)   this M-tile's [sum; sum_of_squares], f32
    # acc_ref  : (TM, TCo)  f32 accumulator scratch across the K axis
    k = pl.program_id(2)

    @pl.when(k == 0)
    def _():
        acc_ref[...] = jnp.zeros_like(acc_ref)

    acc_ref[...] += jnp.dot(p_ref[...], w_ref[...],
                            preferred_element_type=jnp.float32)

    @pl.when(k == pl.num_programs(2) - 1)
    def _():
        conv = acc_ref[...]                                   # exact f32 result
        conv_ref[...] = conv.astype(conv_ref.dtype)           # bf16 to HBM
        stats_ref[0:1, :] = jnp.sum(conv, axis=0, keepdims=True)
        stats_ref[1:2, :] = jnp.sum(conv * conv, axis=0, keepdims=True)


# --------- pass 2: fused scale/shift + ReLU (per-channel math precomputed) --------

def _bn_relu_kernel(conv_ref, scale_ref, shift_ref, o_ref):
    y = conv_ref[...].astype(jnp.float32) * scale_ref[...] + shift_ref[...]
    o_ref[...] = jnp.maximum(y, 0.0).astype(o_ref.dtype)


def conv_batch_norm(x_nchw, w_oihw, bias, gamma, beta, eps=1e-5):
    """Forward of ConvBatchNorm. x_nchw: (N, Cin, H, W) -> (N, Cout, H, W)."""
    # `bias` kept for API parity with nn.Conv2d but intentionally unused:
    # training-mode BatchNorm subtracts the per-channel batch mean, which cancels
    # a constant per-channel conv bias exactly.
    del bias

    N, Ci, H, W = x_nchw.shape
    Co = w_oihw.shape[0]
    in_dtype = x_nchw.dtype
    in_bytes = jnp.dtype(in_dtype).itemsize
    M = N * H * W
    K = 9 * Ci

    # ---- layout glue (plain JAX): NCHW->NHWC, halo pad, im2col --------------------
    x_nhwc = jnp.transpose(x_nchw, (0, 2, 3, 1))
    xp = jnp.pad(x_nhwc, ((0, 0), (1, 1), (1, 1), (0, 0)))
    slabs = [xp[:, kh:kh + H, kw:kw + W, :] for kh in range(3) for kw in range(3)]
    patches = jnp.concatenate(slabs, axis=-1).reshape(M, K)          # (M, 9*Ci)

    # (Co, Ci, kh, kw) -> (kh, kw, Ci, Co) -> (9*Ci, Co): matches patch ordering.
    w_mat = jnp.transpose(w_oihw, (2, 3, 1, 0)).reshape(K, Co).astype(in_dtype)

    # ---- tiling (VMEM-budget aware) + inert zero padding --------------------------
    Co_pad = _round_up(Co, 128)
    budget = _vmem_budget_bytes()
    TM, TK, TCo, K_pad = _pick_tiles(M, K, Co_pad, in_bytes, budget)
    M_pad = _round_up(M, TM)

    patches = jnp.pad(patches, ((0, M_pad - M), (0, K_pad - K)))
    w_mat = jnp.pad(w_mat, ((0, K_pad - K), (0, Co_pad - Co)))

    n_co = Co_pad // TCo
    n_m = M_pad // TM
    n_k = K_pad // TK

    inter_dtype = jnp.bfloat16   # conv intermediate stored half-width in HBM

    # ---- pass 1: conv tiles + per-M-tile partial channel statistics ---------------
    conv_out, stats = pl.pallas_call(
        _conv_stats_kernel,
        out_shape=(
            jax.ShapeDtypeStruct((M_pad, Co_pad), inter_dtype),
            jax.ShapeDtypeStruct((n_m, 2, Co_pad), jnp.float32),
        ),
        grid_spec=pltpu.PrefetchScalarGridSpec(
            num_scalar_prefetch=0,
            grid=(n_co, n_m, n_k),
            in_specs=[
                pl.BlockSpec((TM, TK), lambda i, j, k: (j, k)),
                pl.BlockSpec((TK, TCo), lambda i, j, k: (k, i)),
            ],
            out_specs=[
                pl.BlockSpec((TM, TCo), lambda i, j, k: (j, i)),
                pl.BlockSpec((None, 2, TCo), lambda i, j, k: (j, 0, i)),
            ],
            scratch_shapes=[pltpu.VMEM((TM, TCo), jnp.float32)],
        ),
        compiler_params=pltpu.CompilerParams(
            dimension_semantics=("parallel", "parallel", "arbitrary"),
            vmem_limit_bytes=budget,
        ),
    )(patches, w_mat)

    # ---- tiny hoisted BN math: combine partial stats, build per-channel scale/shift
    gamma_p = jnp.pad(gamma.astype(jnp.float32), (0, Co_pad - Co))
    beta_p = jnp.pad(beta.astype(jnp.float32), (0, Co_pad - Co))
    ssum = jnp.sum(stats, axis=0)                                   # (2, Co_pad)
    inv_n = 1.0 / float(M)
    mean = ssum[0] * inv_n
    var = jnp.maximum(ssum[1] * inv_n - mean * mean, 0.0)           # biased variance
    scale = gamma_p * jax.lax.rsqrt(var + eps)                      # (Co_pad,)
    shift = beta_p - mean * scale
    scale2 = scale.reshape(1, Co_pad)
    shift2 = shift.reshape(1, Co_pad)

    # ---- pass 2: fused normalize + affine + ReLU over the same tiles --------------
    out_flat = pl.pallas_call(
        _bn_relu_kernel,
        out_shape=jax.ShapeDtypeStruct((M_pad, Co_pad), in_dtype),
        grid_spec=pltpu.PrefetchScalarGridSpec(
            num_scalar_prefetch=0,
            grid=(n_co, n_m),
            in_specs=[
                pl.BlockSpec((TM, TCo), lambda i, j: (j, i)),
                pl.BlockSpec((1, TCo), lambda i, j: (0, i)),
                pl.BlockSpec((1, TCo), lambda i, j: (0, i)),
            ],
            out_specs=pl.BlockSpec((TM, TCo), lambda i, j: (j, i)),
        ),
        compiler_params=pltpu.CompilerParams(
            dimension_semantics=("parallel", "parallel"),
            vmem_limit_bytes=budget,
        ),
    )(conv_out, scale2, shift2)

    out = out_flat[:M, :Co].reshape(N, H, W, Co)
    return jnp.transpose(out, (0, 3, 1, 2))


def _reference(x_nchw, w_oihw, bias, gamma, beta, eps=1e-5):
    out = jax.lax.conv_general_dilated(
        x_nchw.astype(jnp.float32), w_oihw.astype(jnp.float32),
        window_strides=(1, 1), padding=((1, 1), (1, 1)),
        dimension_numbers=("NCHW", "OIHW", "NCHW"))
    out = out + bias.reshape(1, -1, 1, 1)
    mean = jnp.mean(out, axis=(0, 2, 3), keepdims=True)
    var = jnp.mean((out - mean) ** 2, axis=(0, 2, 3), keepdims=True)
    out = (out - mean) * jax.lax.rsqrt(var + eps)
    out = out * gamma.reshape(1, -1, 1, 1) + beta.reshape(1, -1, 1, 1)
    return jnp.maximum(out, 0.0)


if __name__ == "__main__":
    key = jax.random.PRNGKey(0)
    k_x, k_w, k_b = jax.random.split(key, 3)

    N, Cin, Cout, H, W = 2, 4, 8, 16, 16
    x = jax.random.normal(k_x, (N, Cin, H, W), dtype=jnp.float32)

    # deterministic parameter init (shapes from nn.Conv2d / nn.BatchNorm2d __init__)
    w = jax.random.normal(k_w, (Cout, Cin, 3, 3), dtype=jnp.float32) * 0.1
    b = jax.random.normal(k_b, (Cout,), dtype=jnp.float32) * 0.1
    gamma = jnp.ones((Cout,), dtype=jnp.float32)   # BN weight default init
    beta = jnp.zeros((Cout,), dtype=jnp.float32)   # BN bias default init

    out = jax.block_until_ready(conv_batch_norm(x, w, b, gamma, beta))
    ref = _reference(x, w, b, gamma, beta)

    assert out.shape == (N, Cout, H, W)
    # bf16 conv intermediate -> ~1e-3-level error after normalization; stats stay f32.
    assert jnp.allclose(out, ref, atol=2e-2, rtol=2e-2), "mismatch vs reference"

    print("KERNEL_OK")
</pallas_src>

<mosaic_0001>
module attributes {stable_mosaic.version = 11 : i64} {
  func.func @_conv_stats_kernel(%arg0: i32, %arg1: i32, %arg2: i32, %arg3: memref<512x128xf32, #tpu.memory_space<vmem>>, %arg4: memref<128x128xf32, #tpu.memory_space<vmem>>, %arg5: memref<512x128xbf16, #tpu.memory_space<vmem>>, %arg6: memref<1x2x128xf32, #tpu.memory_space<vmem>>, %arg7: memref<512x128xf32, #tpu.memory_space<vmem>>) attributes {dimension_semantics = [#tpu.dimension_semantics<parallel>, #tpu.dimension_semantics<parallel>, #tpu.dimension_semantics<arbitrary>], iteration_bounds = array<i64: 1, 1, 1>, scalar_prefetch = 0 : i64, scratch_operands = 1 : i64, tpu.core_type = #tpu.core_type<tc>, window_params = [{transform_indices = @transform_0, window_bounds = array<i64: 512, 128>}, {transform_indices = @transform_1, window_bounds = array<i64: 128, 128>}, {transform_indices = @transform_2, window_bounds = array<i64: 512, 128>}, {transform_indices = @transform_3, window_bounds = array<i64: 1, 2, 128>}]} {
    %c0_i32 = arith.constant 0 : i32
    %0 = arith.cmpi eq, %arg2, %c0_i32 : i32
    %1 = arith.extui %0 : i1 to i32
    %c0_i32_0 = arith.constant 0 : i32
    %2 = arith.cmpi ne, %1, %c0_i32_0 : i32
    scf.if %2 {
      %cst_10 = arith.constant 0.000000e+00 : f32
      %12 = vector.broadcast %cst_10 : f32 to vector<512x128xf32>
      %c0_11 = arith.constant 0 : index
      %c0_12 = arith.constant 0 : index
      %13 = vector.load %arg7[%c0_11, %c0_12] : memref<512x128xf32, #tpu.memory_space<vmem>>, vector<512x128xf32>
      tpu.vector_store %arg7[%c0_11, %c0_12], %12 {strides = array<i32>} : memref<512x128xf32, #tpu.memory_space<vmem>>, vector<512x128xf32>,
    } else {
    }
    %c0 = arith.constant 0 : index
    %c0_1 = arith.constant 0 : index
    %3 = vector.load %arg7[%c0, %c0_1] : memref<512x128xf32, #tpu.memory_space<vmem>>, vector<512x128xf32>
    %c0_2 = arith.constant 0 : index
    %c0_3 = arith.constant 0 : index
    %4 = vector.load %arg3[%c0_2, %c0_3] : memref<512x128xf32, #tpu.memory_space<vmem>>, vector<512x128xf32>
    %c0_4 = arith.constant 0 : index
    %c0_5 = arith.constant 0 : index
    %5 = vector.load %arg4[%c0_4, %c0_5] : memref<128x128xf32, #tpu.memory_space<vmem>>, vector<128x128xf32>
    %cst = arith.constant dense<0.000000e+00> : vector<512x128xf32>
    %6 = tpu.matmul %4, %5, %cst {dimension_numbers = #tpu.dot_dimension_numbers<[1], [0], [0], [1], [0, 0, 1, 1], [], []>} : vector<512x128xf32>, vector<128x128xf32>, vector<512x128xf32> -> vector<512x128xf32>
    %7 = arith.addf %3, %6 : vector<512x128xf32>
    %c0_6 = arith.constant 0 : index
    %c0_7 = arith.constant 0 : index
    %8 = vector.load %arg7[%c0_6, %c0_7] : memref<512x128xf32, #tpu.memory_space<vmem>>, vector<512x128xf32>
    tpu.vector_store %arg7[%c0_6, %c0_7], %7 {strides = array<i32>} : memref<512x128xf32, #tpu.memory_space<vmem>>, vector<512x128xf32>,
    %c0_i32_8 = arith.constant 0 : i32
    %9 = arith.cmpi eq, %arg2, %c0_i32_8 : i32
    %10 = arith.extui %9 : i1 to i32
    %c0_i32_9 = arith.constant 0 : i32
    %11 = arith.cmpi ne, %10, %c0_i32_9 : i32
    scf.if %11 {
      %c0_10 = arith.constant 0 : index
      %c0_11 = arith.constant 0 : index
      %12 = vector.load %arg7[%c0_10, %c0_11] : memref<512x128xf32, #tpu.memory_space<vmem>>, vector<512x128xf32>
      %13 = arith.truncf %12 : vector<512x128xf32> to vector<512x128xbf16>
      %c0_12 = arith.constant 0 : index
      %c0_13 = arith.constant 0 : index
      %14 = vector.load %arg5[%c0_12, %c0_13] : memref<512x128xbf16, #tpu.memory_space<vmem>>, vector<512x128xbf16>
      tpu.vector_store %arg5[%c0_12, %c0_13], %13 {strides = array<i32>} : memref<512x128xbf16, #tpu.memory_space<vmem>>, vector<512x128xbf16>,
      %cst_14 = arith.constant dense<0.000000e+00> : vector<128xf32>
      %15 = vector.multi_reduction <add>, %12, %cst_14 [0] : vector<512x128xf32> to vector<128xf32>
      %16 = vector.shape_cast %15 : vector<128xf32> to vector<1x128xf32>
      %c0_15 = arith.constant 0 : index
      %c0_16 = arith.constant 0 : index
      %c0_17 = arith.constant 0 : index
      %17 = vector.load %arg6[%c0_15, %c0_16, %c0_17] : memref<1x2x128xf32, #tpu.memory_space<vmem>>, vector<1x1x128xf32>
      %18 = vector.shape_cast %17 : vector<1x1x128xf32> to vector<1x128xf32>
      %19 = vector.shape_cast %16 : vector<1x128xf32> to vector<1x1x128xf32>
      tpu.vector_store %arg6[%c0_15, %c0_16, %c0_17], %19 {strides = array<i32>} : memref<1x2x128xf32, #tpu.memory_space<vmem>>, vector<1x1x128xf32>,
      %20 = arith.mulf %12, %12 : vector<512x128xf32>
      %cst_18 = arith.constant dense<0.000000e+00> : vector<128xf32>
      %21 = vector.multi_reduction <add>, %20, %cst_18 [0] : vector<512x128xf32> to vector<128xf32>
      %22 = vector.shape_cast %21 : vector<128xf32> to vector<1x128xf32>
      %c0_19 = arith.constant 0 : index
      %c1 = arith.constant 1 : index
      %c0_20 = arith.constant 0 : index
      %23 = vector.load %arg6[%c0_19, %c1, %c0_20] : memref<1x2x128xf32, #tpu.memory_space<vmem>>, vector<1x1x128xf32>
      %24 = vector.shape_cast %23 : vector<1x1x128xf32> to vector<1x128xf32>
      %25 = vector.shape_cast %22 : vector<1x128xf32> to vector<1x1x128xf32>
      tpu.vector_store %arg6[%c0_19, %c1, %c0_20], %25 {strides = array<i32>} : memref<1x2x128xf32, #tpu.memory_space<vmem>>, vector<1x1x128xf32>,
    } else {
    }
    return
  }
  func.func @transform_0(%arg0: i32, %arg1: i32, %arg2: i32) -> (i32, i32) {
    %c0_i32 = arith.constant 0 : i32
    return %arg1, %arg2 : i32, i32
  }
  func.func @transform_1(%arg0: i32, %arg1: i32, %arg2: i32) -> (i32, i32) {
    %c0_i32 = arith.constant 0 : i32
    return %arg2, %arg0 : i32, i32
  }
  func.func @transform_2(%arg0: i32, %arg1: i32, %arg2: i32) -> (i32, i32) {
    %c0_i32 = arith.constant 0 : i32
    return %arg1, %arg0 : i32, i32
  }
  func.func @transform_3(%arg0: i32, %arg1: i32, %arg2: i32) -> (i32, i32, i32) {
    %c0_i32 = arith.constant 0 : i32
    %c0_i32_0 = arith.constant 0 : i32
    return %arg1, %c0_i32, %arg0 : i32, i32, i32
  }
}

</mosaic_0001>

<llo_original>
// kernel: tpu_custom_call.1
$region0: #{tpu_custom_call.1}
  #allocation0 [shape = 'u32[]', space=smem, size = 0x4, offset = 0x4, fixed_abs, tag = 'smem constant byte address 0x4 - core index']
  #allocation1 [shape = 'u32[144,128]{1,0:T(1,128)}', space=vmem, size = 0x12000, scoped, tag = 'internal scratch']
  #allocation2 [shape = 'f32[512,128]{1,0:T(8,128)}', space=vmem, size = 0x40000, scoped, tag = 'scratch operand']
  %s0 = inlined_call_operand.hbm [shape: f32[512,128], index: 0, kind: input, shape index: {}]
  %s1 = inlined_call_operand.hbm [shape: f32[128,128], index: 1, kind: input, shape index: {}]
  %s2 = inlined_call_operand.hbm [shape: bf16[512,128], index: 2, kind: output, shape index: {0}]
  %s3 = inlined_call_operand.hbm [shape: f32[1,2,128], index: 3, kind: output, shape index: {1}]
  %4 = xla_tuple %s2, %s3
  %s5 = sld [smem:[#allocation0]]
  $region42: #{tpu_custom_call.1} parent=0
    _
  %s7 = ssub.s32 1, %s5
  %s8 = scalar_select 0, %s7, %s5
  $region1: #{tpu_custom_call.1} parent=0
    #allocation3 [shape = 'u8[262144]{0}', space=vmem, size = 0x40000, scoped, tag = 'input window, operand 0, single buffered']
    #allocation4 [shape = 's32[1]{0}', space=sflag, size = 0x4, scoped, tag = 'scoped memory for tpu_custom_call.1']
    #allocation5 [shape = 's32[1]{0}', space=sflag, size = 0x4, scoped, tag = 'scoped memory for tpu_custom_call.1']
    #allocation6 [shape = 'u8[65536]{0}', space=vmem, size = 0x10000, scoped, tag = 'input window, operand 1, single buffered']
    #allocation7 [shape = 's32[1]{0}', space=sflag, size = 0x4, scoped, tag = 'scoped memory for tpu_custom_call.1']
    #allocation8 [shape = 'u8[131072]{0}', space=vmem, size = 0x20000, scoped, tag = 'output window, operand 0, single buffered']
    #allocation9 [shape = 'u8[1024]{0}', space=vmem, size = 0x400, scoped, tag = 'output window, operand 1, single buffered']
    #allocation10 [shape = 's32[1]{0}', space=sflag, size = 0x4, scoped, tag = 'scoped memory for tpu_custom_call.1']
    %9 = vsyncpa [#allocation4], 0
    %10 = vsyncpa [#allocation7], 0
    %11 = vsyncpa [#allocation5], 0
    %12 = vsyncpa [#allocation10], 0
    // Predicated region
    $region2: #{tpu_custom_call.1} parent=1 // pred_check
      _
    $region3: #{tpu_custom_call.1} parent=1 // pred_check_branch
      %14 = sbr.rel (0) target = $region5
    $region4: #{tpu_custom_call.1} parent=1 // pred_region
      %s16 = ssub.s32 8192, 8192
      %17 = vsyncadd [#allocation4], %s16
      %s18 = sshll.u32 [#allocation3], 4
      %s19 = int_to_ptr.vmem [resolvable:$true] %s18
      %24 = dma.hbm_to_vmem [thread:$0]  %s0, 8192, %s19, [#allocation4], 128, 128, 8
    $region5: #{tpu_custom_call.1} parent=1 // pred_fallthru
      _
    // Predicated region
    $region6: #{tpu_custom_call.1} parent=1 // pred_check
      _
    $region7: #{tpu_custom_call.1} parent=1 // pred_check_branch
      %26 = sbr.rel (0) target = $region9
    $region8: #{tpu_custom_call.1} parent=1 // pred_region
      %s28 = ssub.s32 2048, 2048
      %29 = vsyncadd [#allocation7], %s28
      %s30 = sshll.u32 [#allocation6], 4
      %s31 = int_to_ptr.vmem [resolvable:$true] %s30
      %36 = dma.hbm_to_vmem [thread:$0]  %s1, 2048, %s31, [#allocation7], 128, 128, 8
    $region9: #{tpu_custom_call.1} parent=1 // pred_fallthru
      _
    // Predicated region
    $region10: #{tpu_custom_call.1} parent=1 // pred_check
      _
    $region11: #{tpu_custom_call.1} parent=1 // pred_check_branch
      %38 = sbr.rel (0) target = $region13
    $region12: #{tpu_custom_call.1} parent=1 // pred_region
      %39 = dma.done [#allocation4], 8192
    $region13: #{tpu_custom_call.1} parent=1 // pred_fallthru
      _
    // Predicated region
    $region14: #{tpu_custom_call.1} parent=1 // pred_check
      _
    $region15: #{tpu_custom_call.1} parent=1 // pred_check_branch
      %41 = sbr.rel (0) target = $region17
    $region16: #{tpu_custom_call.1} parent=1 // pred_region
      %42 = dma.done [#allocation7], 2048
    $region17: #{tpu_custom_call.1} parent=1 // pred_fallthru
      _
    %p43 = scmp.eq.s32.totalorder 0, 0
    // Predicated region
    $region18: #{tpu_custom_call.1} parent=1 // pred_check
      %p44 = pneg %p43
    $region19: #{tpu_custom_call.1} parent=1 // pred_check_branch
      %46 = sbr.rel (%p44) target = $region21
    $region20: #{tpu_custom_call.1} parent=1 // pred_region
      %47 = vst [vmem:[#allocation2] sm:$0xff] 0.0
      %48 = vst [vmem:[#allocation2 + $0x8] sm:$0xff] 0.0
      %49 = vst [vmem:[#allocation2 + $0x10] sm:$0xff] 0.0
      %50 = vst [vmem:[#allocation2 + $0x18] sm:$0xff] 0.0
      %51 = vst [vmem:[#allocation2 + $0x20] sm:$0xff] 0.0
      %52 = vst [vmem:[#allocation2 + $0x28] sm:$0xff] 0.0
      %53 = vst [vmem:[#allocation2 + $0x30] sm:$0xff] 0.0
      %54 = vst [vmem:[#allocation2 + $0x38] sm:$0xff] 0.0
      %55 = vst [vmem:[#allocation2 + $0x40] sm:$0xff] 0.0
      %56 = vst [vmem:[#allocation2 + $0x48] sm:$0xff] 0.0
      %57 = vst [vmem:[#allocation2 + $0x50] sm:$0xff] 0.0
      %58 = vst [vmem:[#allocation2 + $0x58] sm:$0xff] 0.0
      %59 = vst [vmem:[#allocation2 + $0x60] sm:$0xff] 0.0
      %60 = vst [vmem:[#allocation2 + $0x68] sm:$0xff] 0.0
      %61 = vst [vmem:[#allocation2 + $0x70] sm:$0xff] 0.0
      %62 = vst [vmem:[#allocation2 + $0x78] sm:$0xff] 0.0
      %63 = vst [vmem:[#allocation2 + $0x80] sm:$0xff] 0.0
      %64 = vst [vmem:[#allocation2 + $0x88] sm:$0xff] 0.0
      %65 = vst [vmem:[#allocation2 + $0x90] sm:$0xff] 0.0
      %66 = vst [vmem:[#allocation2 + $0x98] sm:$0xff] 0.0
      %67 = vst [vmem:[#allocation2 + $0xa0] sm:$0xff] 0.0
      %68 = vst [vmem:[#allocation2 + $0xa8] sm:$0xff] 0.0
      %69 = vst [vmem:[#allocation2 + $0xb0] sm:$0xff] 0.0
      %70 = vst [vmem:[#allocation2 + $0xb8] sm:$0xff] 0.0
      %71 = vst [vmem:[#allocation2 + $0xc0] sm:$0xff] 0.0
      %72 = vst [vmem:[#allocation2 + $0xc8] sm:$0xff] 0.0
      %73 = vst [vmem:[#allocation2 + $0xd0] sm:$0xff] 0.0
      %74 = vst [vmem:[#allocation2 + $0xd8] sm:$0xff] 0.0
      %75 = vst [vmem:[#allocation2 + $0xe0] sm:$0xff] 0.0
      %76 = vst [vmem:[#allocation2 + $0xe8] sm:$0xff] 0.0
      %77 = vst [vmem:[#allocation2 + $0xf0] sm:$0xff] 0.0
      %78 = vst [vmem:[#allocation2 + $0xf8] sm:$0xff] 0.0
      %79 = vst [vmem:[#allocation2 + $0x100] sm:$0xff] 0.0
      %80 = vst [vmem:[#allocation2 + $0x108] sm:$0xff] 0.0
      %81 = vst [vmem:[#allocation2 + $0x110] sm:$0xff] 0.0
      %82 = vst [vmem:[#allocation2 + $0x118] sm:$0xff] 0.0
      %83 = vst [vmem:[#allocation2 + $0x120] sm:$0xff] 0.0
      %84 = vst [vmem:[#allocation2 + $0x128] sm:$0xff] 0.0
      %85 = vst [vmem:[#allocation2 + $0x130] sm:$0xff] 0.0
      %86 = vst [vmem:[#allocation2 + $0x138] sm:$0xff] 0.0
      %87 = vst [vmem:[#allocation2 + $0x140] sm:$0xff] 0.0
      %88 = vst [vmem:[#allocation2 + $0x148] sm:$0xff] 0.0
      %89 = vst [vmem:[#allocation2 + $0x150] sm:$0xff] 0.0
      %90 = vst [vmem:[#allocation2 + $0x158] sm:$0xff] 0.0
      %91 = vst [vmem:[#allocation2 + $0x160] sm:$0xff] 0.0
      %92 = vst [vmem:[#allocation2 + $0x168] sm:$0xff] 0.0
      %93 = vst [vmem:[#allocation2 + $0x170] sm:$0xff] 0.0
      %94 = vst [vmem:[#allocation2 + $0x178] sm:$0xff] 0.0
      %95 = vst [vmem:[#allocation2 + $0x180] sm:$0xff] 0.0
      %96 = vst [vmem:[#allocation2 + $0x188] sm:$0xff] 0.0
      %97 = vst [vmem:[#allocation2 + $0x190] sm:$0xff] 0.0
      %98 = vst [vmem:[#allocation2 + $0x198] sm:$0xff] 0.0
      %99 = vst [vmem:[#allocation2 + $0x1a0] sm:$0xff] 0.0
      %100 = vst [vmem:[#allocation2 + $0x1a8] sm:$0xff] 0.0
      %101 = vst [vmem:[#allocation2 + $0x1b0] sm:$0xff] 0.0
      %102 = vst [vmem:[#allocation2 + $0x1b8] sm:$0xff] 0.0
      %103 = vst [vmem:[#allocation2 + $0x1c0] sm:$0xff] 0.0
      %104 = vst [vmem:[#allocation2 + $0x1c8] sm:$0xff] 0.0
      %105 = vst [vmem:[#allocation2 + $0x1d0] sm:$0xff] 0.0
      %106 = vst [vmem:[#allocation2 + $0x1d8] sm:$0xff] 0.0
      %107 = vst [vmem:[#allocation2 + $0x1e0] sm:$0xff] 0.0
      %108 = vst [vmem:[#allocation2 + $0x1e8] sm:$0xff] 0.0
      %109 = vst [vmem:[#allocation2 + $0x1f0] sm:$0xff] 0.0
      %110 = vst [vmem:[#allocation2 + $0x1f8] sm:$0xff] 0.0
    $region21: #{tpu_custom_call.1} parent=1 // pred_fallthru
      _
    %v111 = vld [vmem:[#allocation2] sm:$0xff]
    %v112 = vld [vmem:[#allocation2 + $0x8] sm:$0xff]
    %v113 = vld [vmem:[#allocation2 + $0x10] sm:$0xff]
    %v114 = vld [vmem:[#allocation2 + $0x18] sm:$0xff]
    %v115 = vld [vmem:[#allocation2 + $0x20] sm:$0xff]
    %v116 = vld [vmem:[#allocation2 + $0x28] sm:$0xff]
    %v117 = vld [vmem:[#allocation2 + $0x30] sm:$0xff]
    %v118 = vld [vmem:[#allocation2 + $0x38] sm:$0xff]
    %v119 = vld [vmem:[#allocation2 + $0x40] sm:$0xff]
    %v120 = vld [vmem:[#allocation2 + $0x48] sm:$0xff]
    %v121 = vld [vmem:[#allocation2 + $0x50] sm:$0xff]
    %v122 = vld [vmem:[#allocation2 + $0x58] sm:$0xff]
    %v123 = vld [vmem:[#allocation2 + $0x60] sm:$0xff]
    %v124 = vld [vmem:[#allocation2 + $0x68] sm:$0xff]
    %v125 = vld [vmem:[#allocation2 + $0x70] sm:$0xff]
    %v126 = vld [vmem:[#allocation2 + $0x78] sm:$0xff]
    %v127 = vld [vmem:[#allocation2 + $0x80] sm:$0xff]
    %v128 = vld [vmem:[#allocation2 + $0x88] sm:$0xff]
    %v129 = vld [vmem:[#allocation2 + $0x90] sm:$0xff]
    %v130 = vld [vmem:[#allocation2 + $0x98] sm:$0xff]
    %v131 = vld [vmem:[#allocation2 + $0xa0] sm:$0xff]
    %v132 = vld [vmem:[#allocation2 + $0xa8] sm:$0xff]
    %v133 = vld [vmem:[#allocation2 + $0xb0] sm:$0xff]
    %v134 = vld [vmem:[#allocation2 + $0xb8] sm:$0xff]
    %v135 = vld [vmem:[#allocation2 + $0xc0] sm:$0xff]
    %v136 = vld [vmem:[#allocation2 + $0xc8] sm:$0xff]
    %v137 = vld [vmem:[#allocation2 + $0xd0] sm:$0xff]
    %v138 = vld [vmem:[#allocation2 + $0xd8] sm:$0xff]
    %v139 = vld [vmem:[#allocation2 + $0xe0] sm:$0xff]
    %v140 = vld [vmem:[#allocation2 + $0xe8] sm:$0xff]
    %v141 = vld [vmem:[#allocation2 + $0xf0] sm:$0xff]
    %v142 = vld [vmem:[#allocation2 + $0xf8] sm:$0xff]
    %v143 = vld [vmem:[#allocation2 + $0x100] sm:$0xff]
    %v144 = vld [vmem:[#allocation2 + $0x108] sm:$0xff]
    %v145 = vld [vmem:[#allocation2 + $0x110] sm:$0xff]
    %v146 = vld [vmem:[#allocation2 + $0x118] sm:$0xff]
    %v147 = vld [vmem:[#allocation2 + $0x120] sm:$0xff]
    %v148 = vld [vmem:[#allocation2 + $0x128] sm:$0xff]
    %v149 = vld [vmem:[#allocation2 + $0x130] sm:$0xff]
    %v150 = vld [vmem:[#allocation2 + $0x138] sm:$0xff]
    %v151 = vld [vmem:[#allocation2 + $0x140] sm:$0xff]
    %v152 = vld [vmem:[#allocation2 + $0x148] sm:$0xff]
    %v153 = vld [vmem:[#allocation2 + $0x150] sm:$0xff]
    %v154 = vld [vmem:[#allocation2 + $0x158] sm:$0xff]
    %v155 = vld [vmem:[#allocation2 + $0x160] sm:$0xff]
    %v156 = vld [vmem:[#allocation2 + $0x168] sm:$0xff]
    %v157 = vld [vmem:[#allocation2 + $0x170] sm:$0xff]
    %v158 = vld [vmem:[#allocation2 + $0x178] sm:$0xff]
    %v159 = vld [vmem:[#allocation2 + $0x180] sm:$0xff]
    %v160 = vld [vmem:[#allocation2 + $0x188] sm:$0xff]
    %v161 = vld [vmem:[#allocation2 + $0x190] sm:$0xff]
    %v162 = vld [vmem:[#allocation2 + $0x198] sm:$0xff]
    %v163 = vld [vmem:[#allocation2 + $0x1a0] sm:$0xff]
    %v164 = vld [vmem:[#allocation2 + $0x1a8] sm:$0xff]
    %v165 = vld [vmem:[#allocation2 + $0x1b0] sm:$0xff]
    %v166 = vld [vmem:[#allocation2 + $0x1b8] sm:$0xff]
    %v167 = vld [vmem:[#allocation2 + $0x1c0] sm:$0xff]
    %v168 = vld [vmem:[#allocation2 + $0x1c8] sm:$0xff]
    %v169 = vld [vmem:[#allocation2 + $0x1d0] sm:$0xff]
    %v170 = vld [vmem:[#allocation2 + $0x1d8] sm:$0xff]
    %v171 = vld [vmem:[#allocation2 + $0x1e0] sm:$0xff]
    %v172 = vld [vmem:[#allocation2 + $0x1e8] sm:$0xff]
    %v173 = vld [vmem:[#allocation2 + $0x1f0] sm:$0xff]
    %v174 = vld [vmem:[#allocation2 + $0x1f8] sm:$0xff]
    %v175 = vld [vmem:[#allocation3] sm:$0xff]
    %v176 = vld [vmem:[#allocation3 + $0x8] sm:$0xff]
    %v177 = vld [vmem:[#allocation3 + $0x10] sm:$0xff]
    %v178 = vld [vmem:[#allocation3 + $0x18] sm:$0xff]
    %v179 = vld [vmem:[#allocation3 + $0x20] sm:$0xff]
    %v180 = vld [vmem:[#allocation3 + $0x28] sm:$0xff]
    %v181 = vld [vmem:[#allocation3 + $0x30] sm:$0xff]
    %v182 = vld [vmem:[#allocation3 + $0x38] sm:$0xff]
    %v183 = vld [vmem:[#allocation3 + $0x40] sm:$0xff]
    %v184 = vld [vmem:[#allocation3 + $0x48] sm:$0xff]
    %v185 = vld [vmem:[#allocation3 + $0x50] sm:$0xff]
    %v186 = vld [vmem:[#allocation3 + $0x58] sm:$0xff]
    %v187 = vld [vmem:[#allocation3 + $0x60] sm:$0xff]
    %v188 = vld [vmem:[#allocation3 + $0x68] sm:$0xff]
    %v189 = vld [vmem:[#allocation3 + $0x70] sm:$0xff]
    %v190 = vld [vmem:[#allocation3 + $0x78] sm:$0xff]
    %v191 = vld [vmem:[#allocation3 + $0x80] sm:$0xff]
    %v192 = vld [vmem:[#allocation3 + $0x88] sm:$0xff]
    %v193 = vld [vmem:[#allocation3 + $0x90] sm:$0xff]
    %v194 = vld [vmem:[#allocation3 + $0x98] sm:$0xff]
    %v195 = vld [vmem:[#allocation3 + $0xa0] sm:$0xff]
    %v196 = vld [vmem:[#allocation3 + $0xa8] sm:$0xff]
    %v197 = vld [vmem:[#allocation3 + $0xb0] sm:$0xff]
    %v198 = vld [vmem:[#allocation3 + $0xb8] sm:$0xff]
    %v199 = vld [vmem:[#allocation3 + $0xc0] sm:$0xff]
    %v200 = vld [vmem:[#allocation3 + $0xc8] sm:$0xff]
    %v201 = vld [vmem:[#allocation3 + $0xd0] sm:$0xff]
    %v202 = vld [vmem:[#allocation3 + $0xd8] sm:$0xff]
    %v203 = vld [vmem:[#allocation3 + $0xe0] sm:$0xff]
    %v204 = vld [vmem:[#allocation3 + $0xe8] sm:$0xff]
    %v205 = vld [vmem:[#allocation3 + $0xf0] sm:$0xff]
    %v206 = vld [vmem:[#allocation3 + $0xf8] sm:$0xff]
    %v207 = vld [vmem:[#allocation3 + $0x100] sm:$0xff]
    %v208 = vld [vmem:[#allocation3 + $0x108] sm:$0xff]
    %v209 = vld [vmem:[#allocation3 + $0x110] sm:$0xff]
    %v210 = vld [vmem:[#allocation3 + $0x118] sm:$0xff]
    %v211 = vld [vmem:[#allocation3 + $0x120] sm:$0xff]
    %v212 = vld [vmem:[#allocation3 + $0x128] sm:$0xff]
    %v213 = vld [vmem:[#allocation3 + $0x130] sm:$0xff]
    %v214 = vld [vmem:[#allocation3 + $0x138] sm:$0xff]
    %v215 = vld [vmem:[#allocation3 + $0x140] sm:$0xff]
    %v216 = vld [vmem:[#allocation3 + $0x148] sm:$0xff]
    %v217 = vld [vmem:[#allocation3 + $0x150] sm:$0xff]
    %v218 = vld [vmem:[#allocation3 + $0x158] sm:$0xff]
    %v219 = vld [vmem:[#allocation3 + $0x160] sm:$0xff]
    %v220 = vld [vmem:[#allocation3 + $0x168] sm:$0xff]
    %v221 = vld [vmem:[#allocation3 + $0x170] sm:$0xff]
    %v222 = vld [vmem:[#allocation3 + $0x178] sm:$0xff]
    %v223 = vld [vmem:[#allocation3 + $0x180] sm:$0xff]
    %v224 = vld [vmem:[#allocation3 + $0x188] sm:$0xff]
    %v225 = vld [vmem:[#allocation3 + $0x190] sm:$0xff]
    %v226 = vld [vmem:[#allocation3 + $0x198] sm:$0xff]
    %v227 = vld [vmem:[#allocation3 + $0x1a0] sm:$0xff]
    %v228 = vld [vmem:[#allocation3 + $0x1a8] sm:$0xff]
    %v229 = vld [vmem:[#allocation3 + $0x1b0] sm:$0xff]
    %v230 = vld [vmem:[#allocation3 + $0x1b8] sm:$0xff]
    %v231 = vld [vmem:[#allocation3 + $0x1c0] sm:$0xff]
    %v232 = vld [vmem:[#allocation3 + $0x1c8] sm:$0xff]
    %v233 = vld [vmem:[#allocation3 + $0x1d0] sm:$0xff]
    %v234 = vld [vmem:[#allocation3 + $0x1d8] sm:$0xff]
    %v235 = vld [vmem:[#allocation3 + $0x1e0] sm:$0xff]
    %v236 = vld [vmem:[#allocation3 + $0x1e8] sm:$0xff]
    %v237 = vld [vmem:[#allocation3 + $0x1f0] sm:$0xff]
    %v238 = vld [vmem:[#allocation3 + $0x1f8] sm:$0xff]
    %v239 = vld [vmem:[#allocation6] sm:$0xff]
    %v240 = vld [vmem:[#allocation6 + $0x8] sm:$0xff]
    %v241 = vld [vmem:[#allocation6 + $0x10] sm:$0xff]
    %v242 = vld [vmem:[#allocation6 + $0x18] sm:$0xff]
    %v243 = vld [vmem:[#allocation6 + $0x20] sm:$0xff]
    %v244 = vld [vmem:[#allocation6 + $0x28] sm:$0xff]
    %v245 = vld [vmem:[#allocation6 + $0x30] sm:$0xff]
    %v246 = vld [vmem:[#allocation6 + $0x38] sm:$0xff]
    %v247 = vld [vmem:[#allocation6 + $0x40] sm:$0xff]
    %v248 = vld [vmem:[#allocation6 + $0x48] sm:$0xff]
    %v249 = vld [vmem:[#allocation6 + $0x50] sm:$0xff]
    %v250 = vld [vmem:[#allocation6 + $0x58] sm:$0xff]
    %v251 = vld [vmem:[#allocation6 + $0x60] sm:$0xff]
    %v252 = vld [vmem:[#allocation6 + $0x68] sm:$0xff]
    %v253 = vld [vmem:[#allocation6 + $0x70] sm:$0xff]
    %v254 = vld [vmem:[#allocation6 + $0x78] sm:$0xff]
    %255 = vmatprep.subr.mxu0 0.0
    %256 = vmatpush1.msra.mxu0 %v239
    %257 = vmatprep.subr.mxu0 0.0
    %258 = vmatpush1.msra.mxu0 %v240
    %259 = vmatprep.subr.mxu0 0.0
    %260 = vmatpush1.msra.mxu0 %v241
    %261 = vmatprep.subr.mxu0 0.0
    %262 = vmatpush1.msra.mxu0 %v242
    %263 = vmatprep.subr.mxu0 0.0
    %264 = vmatpush1.msra.mxu0 %v243
    %265 = vmatprep.subr.mxu0 0.0
    %266 = vmatpush1.msra.mxu0 %v244
    %267 = vmatprep.subr.mxu0 0.0
    %268 = vmatpush1.msra.mxu0 %v245
    %269 = vmatprep.subr.mxu0 0.0
    %270 = vmatpush1.msra.mxu0 %v246
    %271 = vmatprep.subr.mxu0 0.0
    %272 = vmatpush1.msra.mxu0 %v247
    %273 = vmatprep.subr.mxu0 0.0
    %274 = vmatpush1.msra.mxu0 %v248
    %275 = vmatprep.subr.mxu0 0.0
    %276 = vmatpush1.msra.mxu0 %v249
    %277 = vmatprep.subr.mxu0 0.0
    %278 = vmatpush1.msra.mxu0 %v250
    %279 = vmatprep.subr.mxu0 0.0
    %280 = vmatpush1.msra.mxu0 %v251
    %281 = vmatprep.subr.mxu0 0.0
    %282 = vmatpush1.msra.mxu0 %v252
    %283 = vmatprep.subr.mxu0 0.0
    %284 = vmatpush1.msra.mxu0 %v253
    %285 = vmatprep.subr.mxu0 0.0
    %286 = vmatpush1.msra.mxu0 %v254
    %287 = vmatprep.subr.mxu0 0.0
    %288 = vmatpush1.msra.mxu0 0.0
    %289 = vmatprep.subr.mxu0 0.0
    %290 = vmatpush1.msra.mxu0 0.0
    %291 = vmatprep.subr.mxu0 0.0
    %292 = vmatpush1.msra.mxu0 0.0
    %293 = vmatprep.subr.mxu0 0.0
    %294 = vmatpush1.msra.mxu0 0.0
    %295 = vmatprep.subr.mxu0 0.0
    %296 = vmatpush1.msra.mxu0 0.0
    %297 = vmatprep.subr.mxu0 0.0
    %298 = vmatpush1.msra.mxu0 0.0
    %299 = vmatprep.subr.mxu0 0.0
    %300 = vmatpush1.msra.mxu0 0.0
    %301 = vmatprep.subr.mxu0 0.0
    %302 = vmatpush1.msra.mxu0 0.0
    %303 = vmatprep.subr.mxu0 0.0
    %304 = vmatpush1.msra.mxu0 0.0
    %305 = vmatprep.subr.mxu0 0.0
    %306 = vmatpush1.msra.mxu0 0.0
    %307 = vmatprep.subr.mxu0 0.0
    %308 = vmatpush1.msra.mxu0 0.0
    %309 = vmatprep.subr.mxu0 0.0
    %310 = vmatpush1.msra.mxu0 0.0
    %311 = vmatprep.subr.mxu0 0.0
    %312 = vmatpush1.msra.mxu0 0.0
    %313 = vmatprep.subr.mxu0 0.0
    %314 = vmatpush1.msra.mxu0 0.0
    %315 = vmatprep.subr.mxu0 0.0
    %316 = vmatpush1.msra.mxu0 0.0
    %317 = vmatprep.subr.mxu0 0.0
    %318 = vmatpush1.msra.mxu0 0.0
    %319 = vmatprep.mubr.f32.mxu0 0.0
    %320 = vmatmul.mubr.f32.gmra.mrb[0].mxu0 %v175
    %v321 = vpop.f32.mrb[0].mxu0
    %v322 = vadd.f32 0.0, %v321
    %v323 = vpop.f32.mrb[0].mxu0
    %324 = vmatprep.mubr.f32.mxu0 0.0
    %325 = vmatmul.mubr.f32.gmra.mrb[0].mxu0 %v176
    %v326 = vpop.f32.mrb[0].mxu0
    %v327 = vadd.f32 0.0, %v326
    %v328 = vpop.f32.mrb[0].mxu0
    %329 = vmatprep.mubr.f32.mxu0 0.0
    %330 = vmatmul.mubr.f32.gmra.mrb[0].mxu0 %v177
    %v331 = vpop.f32.mrb[0].mxu0
    %v332 = vadd.f32 0.0, %v331
    %v333 = vpop.f32.mrb[0].mxu0
    %334 = vmatprep.mubr.f32.mxu0 0.0
    %335 = vmatmul.mubr.f32.gmra.mrb[0].mxu0 %v178
    %v336 = vpop.f32.mrb[0].mxu0
    %v337 = vadd.f32 0.0, %v336
    %v338 = vpop.f32.mrb[0].mxu0
    %339 = vmatprep.mubr.f32.mxu0 0.0
    %340 = vmatmul.mubr.f32.gmra.mrb[0].mxu0 %v179
    %v341 = vpop.f32.mrb[0].mxu0
    %v342 = vadd.f32 0.0, %v341
    %v343 = vpop.f32.mrb[0].mxu0
    %344 = vmatprep.mubr.f32.mxu0 0.0
    %345 = vmatmul.mubr.f32.gmra.mrb[0].mxu0 %v180
    %v346 = vpop.f32.mrb[0].mxu0
    %v347 = vadd.f32 0.0, %v346
    %v348 = vpop.f32.mrb[0].mxu0
    %349 = vmatprep.mubr.f32.mxu0 0.0
    %350 = vmatmul.mubr.f32.gmra.mrb[0].mxu0 %v181
    %v351 = vpop.f32.mrb[0].mxu0
    %v352 = vadd.f32 0.0, %v351
    %v353 = vpop.f32.mrb[0].mxu0
    %354 = vmatprep.mubr.f32.mxu0 0.0
    %355 = vmatmul.mubr.f32.gmra.mrb[0].mxu0 %v182
    %v356 = vpop.f32.mrb[0].mxu0
    %v357 = vadd.f32 0.0, %v356
    %v358 = vpop.f32.mrb[0].mxu0
    %359 = vmatprep.mubr.f32.mxu0 0.0
    %360 = vmatmul.mubr.f32.gmra.mrb[0].mxu0 %v183
    %v361 = vpop.f32.mrb[0].mxu0
    %v362 = vadd.f32 0.0, %v361
    %v363 = vpop.f32.mrb[0].mxu0
    %364 = vmatprep.mubr.f32.mxu0 0.0
    %365 = vmatmul.mubr.f32.gmra.mrb[0].mxu0 %v184
    %v366 = vpop.f32.mrb[0].mxu0
    %v367 = vadd.f32 0.0, %v366
    %v368 = vpop.f32.mrb[0].mxu0
    %369 = vmatprep.mubr.f32.mxu0 0.0
    %370 = vmatmul.mubr.f32.gmra.mrb[0].mxu0 %v185
    %v371 = vpop.f32.mrb[0].mxu0
    %v372 = vadd.f32 0.0, %v371
    %v373 = vpop.f32.mrb[0].mxu0
    %374 = vmatprep.mubr.f32.mxu0 0.0
    %375 = vmatmul.mubr.f32.gmra.mrb[0].mxu0 %v186
    %v376 = vpop.f32.mrb[0].mxu0
    %v377 = vadd.f32 0.0, %v376
    %v378 = vpop.f32.mrb[0].mxu0
    %379 = vmatprep.mubr.f32.mxu0 0.0
    %380 = vmatmul.mubr.f32.gmra.mrb[0].mxu0 %v187
    %v381 = vpop.f32.mrb[0].mxu0
    %v382 = vadd.f32 0.0, %v381
    %v383 = vpop.f32.mrb[0].mxu0
    %384 = vmatprep.mubr.f32.mxu0 0.0
    %385 = vmatmul.mubr.f32.gmra.mrb[0].mxu0 %v188
    %v386 = vpop.f32.mrb[0].mxu0
    %v387 = vadd.f32 0.0, %v386
    %v388 = vpop.f32.mrb[0].mxu0
    %389 = vmatprep.mubr.f32.mxu0 0.0
    %390 = vmatmul.mubr.f32.gmra.mrb[0].mxu0 %v189
    %v391 = vpop.f32.mrb[0].mxu0
    %v392 = vadd.f32 0.0, %v391
    %v393 = vpop.f32.mrb[0].mxu0
    %394 = vmatprep.mubr.f32.mxu0 0.0
    %395 = vmatmul.mubr.f32.gmra.mrb[0].mxu0 %v190
    %v396 = vpop.f32.mrb[0].mxu0
    %v397 = vadd.f32 0.0, %v396
    %v398 = vpop.f32.mrb[0].mxu0
    %399 = vmatprep.mubr.f32.mxu0 0.0
    %400 = vmatmul.mubr.f32.gmra.mrb[0].mxu0 %v191
    %v401 = vpop.f32.mrb[0].mxu0
    %v402 = vadd.f32 0.0, %v401
    %v403 = vpop.f32.mrb[0].mxu0
    %404 = vmatprep.mubr.f32.mxu0 0.0
    %405 = vmatmul.mubr.f32.gmra.mrb[0].mxu0 %v192
    %v406 = vpop.f32.mrb[0].mxu0
    %v407 = vadd.f32 0.0, %v406
    %v408 = vpop.f32.mrb[0].mxu0
    %409 = vmatprep.mubr.f32.mxu0 0.0
    %410 = vmatmul.mubr.f32.gmra.mrb[0].mxu0 %v193
    %v411 = vpop.f32.mrb[0].mxu0
    %v412 = vadd.f32 0.0, %v411
    %v413 = vpop.f32.mrb[0].mxu0
    %414 = vmatprep.mubr.f32.mxu0 0.0
    %415 = vmatmul.mubr.f32.gmra.mrb[0].mxu0 %v194
    %v416 = vpop.f32.mrb[0].mxu0
    %v417 = vadd.f32 0.0, %v416
    %v418 = vpop.f32.mrb[0].mxu0
    %419 = vmatprep.mubr.f32.mxu0 0.0
    %420 = vmatmul.mubr.f32.gmra.mrb[0].mxu0 %v195
    %v421 = vpop.f32.mrb[0].mxu0
    %v422 = vadd.f32 0.0, %v421
    %v423 = vpop.f32.mrb[0].mxu0
    %424 = vmatprep.mubr.f32.mxu0 0.0
    %425 = vmatmul.mubr.f32.gmra.mrb[0].mxu0 %v196
    %v426 = vpop.f32.mrb[0].mxu0
    %v427 = vadd.f32 0.0, %v426
    %v428 = vpop.f32.mrb[0].mxu0
    %429 = vmatprep.mubr.f32.mxu0 0.0
    %430 = vmatmul.mubr.f32.gmra.mrb[0].mxu0 %v197
    %v431 = vpop.f32.mrb[0].mxu0
    %v432 = vadd.f32 0.0, %v431
    %v433 = vpop.f32.mrb[0].mxu0
    %434 = vmatprep.mubr.f32.mxu0 0.0
    %435 = vmatmul.mubr.f32.gmra.mrb[0].mxu0 %v198
    %v436 = vpop.f32.mrb[0].mxu0
    %v437 = vadd.f32 0.0, %v436
    %v438 = vpop.f32.mrb[0].mxu0
    %439 = vmatprep.mubr.f32.mxu0 0.0
    %440 = vmatmul.mubr.f32.gmra.mrb[0].mxu0 %v199
    %v441 = vpop.f32.mrb[0].mxu0
    %v442 = vadd.f32 0.0, %v441
    %v443 = vpop.f32.mrb[0].mxu0
    %444 = vmatprep.mubr.f32.mxu0 0.0
    %445 = vmatmul.mubr.f32.gmra.mrb[0].mxu0 %v200
    %v446 = vpop.f32.mrb[0].mxu0
    %v447 = vadd.f32 0.0, %v446
    %v448 = vpop.f32.mrb[0].mxu0
    %449 = vmatprep.mubr.f32.mxu0 0.0
    %450 = vmatmul.mubr.f32.gmra.mrb[0].mxu0 %v201
    %v451 = vpop.f32.mrb[0].mxu0
    %v452 = vadd.f32 0.0, %v451
    %v453 = vpop.f32.mrb[0].mxu0
    %454 = vmatprep.mubr.f32.mxu0 0.0
    %455 = vmatmul.mubr.f32.gmra.mrb[0].mxu0 %v202
    %v456 = vpop.f32.mrb[0].mxu0
    %v457 = vadd.f32 0.0, %v456
    %v458 = vpop.f32.mrb[0].mxu0
    %459 = vmatprep.mubr.f32.mxu0 0.0
    %460 = vmatmul.mubr.f32.gmra.mrb[0].mxu0 %v203
    %v461 = vpop.f32.mrb[0].mxu0
    %v462 = vadd.f32 0.0, %v461
    %v463 = vpop.f32.mrb[0].mxu0
    %464 = vmatprep.mubr.f32.mxu0 0.0
    %465 = vmatmul.mubr.f32.gmra.mrb[0].mxu0 %v204
    %v466 = vpop.f32.mrb[0].mxu0
    %v467 = vadd.f32 0.0, %v466
    %v468 = vpop.f32.mrb[0].mxu0
    %469 = vmatprep.mubr.f32.mxu0 0.0
    %470 = vmatmul.mubr.f32.gmra.mrb[0].mxu0 %v205
    %v471 = vpop.f32.mrb[0].mxu0
    %v472 = vadd.f32 0.0, %v471
    %v473 = vpop.f32.mrb[0].mxu0
    %474 = vmatprep.mubr.f32.mxu0 0.0
    %475 = vmatmul.mubr.f32.gmra.mrb[0].mxu0 %v206
    %v476 = vpop.f32.mrb[0].mxu0
    %v477 = vadd.f32 0.0, %v476
    %v478 = vpop.f32.mrb[0].mxu0
    %479 = vmatprep.mubr.f32.mxu0 0.0
    %480 = vmatmul.mubr.f32.gmra.mrb[0].mxu0 %v207
    %v481 = vpop.f32.mrb[0].mxu0
    %v482 = vadd.f32 0.0, %v481
    %v483 = vpop.f32.mrb[0].mxu0
    %484 = vmatprep.mubr.f32.mxu0 0.0
    %485 = vmatmul.mubr.f32.gmra.mrb[0].mxu0 %v208
    %v486 = vpop.f32.mrb[0].mxu0
    %v487 = vadd.f32 0.0, %v486
    %v488 = vpop.f32.mrb[0].mxu0
    %489 = vmatprep.mubr.f32.mxu0 0.0
    %490 = vmatmul.mubr.f32.gmra.mrb[0].mxu0 %v209
    %v491 = vpop.f32.mrb[0].mxu0
    %v492 = vadd.f32 0.0, %v491
    %v493 = vpop.f32.mrb[0].mxu0
    %494 = vmatprep.mubr.f32.mxu0 0.0
    %495 = vmatmul.mubr.f32.gmra.mrb[0].mxu0 %v210
    %v496 = vpop.f32.mrb[0].mxu0
    %v497 = vadd.f32 0.0, %v496
    %v498 = vpop.f32.mrb[0].mxu0
    %499 = vmatprep.mubr.f32.mxu0 0.0
    %500 = vmatmul.mubr.f32.gmra.mrb[0].mxu0 %v211
    %v501 = vpop.f32.mrb[0].mxu0
    %v502 = vadd.f32 0.0, %v501
    %v503 = vpop.f32.mrb[0].mxu0
    %504 = vmatprep.mubr.f32.mxu0 0.0
    %505 = vmatmul.mubr.f32.gmra.mrb[0].mxu0 %v212
    %v506 = vpop.f32.mrb[0].mxu0
    %v507 = vadd.f32 0.0, %v506
    %v508 = vpop.f32.mrb[0].mxu0
    %509 = vmatprep.mubr.f32.mxu0 0.0
    %510 = vmatmul.mubr.f32.gmra.mrb[0].mxu0 %v213
    %v511 = vpop.f32.mrb[0].mxu0
    %v512 = vadd.f32 0.0, %v511
    %v513 = vpop.f32.mrb[0].mxu0
    %514 = vmatprep.mubr.f32.mxu0 0.0
    %515 = vmatmul.mubr.f32.gmra.mrb[0].mxu0 %v214
    %v516 = vpop.f32.mrb[0].mxu0
    %v517 = vadd.f32 0.0, %v516
    %v518 = vpop.f32.mrb[0].mxu0
    %519 = vmatprep.mubr.f32.mxu0 0.0
    %520 = vmatmul.mubr.f32.gmra.mrb[0].mxu0 %v215
    %v521 = vpop.f32.mrb[0].mxu0
    %v522 = vadd.f32 0.0, %v521
    %v523 = vpop.f32.mrb[0].mxu0
    %524 = vmatprep.mubr.f32.mxu0 0.0
    %525 = vmatmul.mubr.f32.gmra.mrb[0].mxu0 %v216
    %v526 = vpop.f32.mrb[0].mxu0
    %v527 = vadd.f32 0.0, %v526
    %v528 = vpop.f32.mrb[0].mxu0
    %529 = vmatprep.mubr.f32.mxu0 0.0
    %530 = vmatmul.mubr.f32.gmra.mrb[0].mxu0 %v217
    %v531 = vpop.f32.mrb[0].mxu0
    %v532 = vadd.f32 0.0, %v531
    %v533 = vpop.f32.mrb[0].mxu0
    %534 = vmatprep.mubr.f32.mxu0 0.0
    %535 = vmatmul.mubr.f32.gmra.mrb[0].mxu0 %v218
    %v536 = vpop.f32.mrb[0].mxu0
    %v537 = vadd.f32 0.0, %v536
    %v538 = vpop.f32.mrb[0].mxu0
    %539 = vmatprep.mubr.f32.mxu0 0.0
    %540 = vmatmul.mubr.f32.gmra.mrb[0].mxu0 %v219
    %v541 = vpop.f32.mrb[0].mxu0
    %v542 = vadd.f32 0.0, %v541
    %v543 = vpop.f32.mrb[0].mxu0
    %544 = vmatprep.mubr.f32.mxu0 0.0
    %545 = vmatmul.mubr.f32.gmra.mrb[0].mxu0 %v220
    %v546 = vpop.f32.mrb[0].mxu0
    %v547 = vadd.f32 0.0, %v546
    %v548 = vpop.f32.mrb[0].mxu0
    %549 = vmatprep.mubr.f32.mxu0 0.0
    %550 = vmatmul.mubr.f32.gmra.mrb[0].mxu0 %v221
    %v551 = vpop.f32.mrb[0].mxu0
    %v552 = vadd.f32 0.0, %v551
    %v553 = vpop.f32.mrb[0].mxu0
    %554 = vmatprep.mubr.f32.mxu0 0.0
    %555 = vmatmul.mubr.f32.gmra.mrb[0].mxu0 %v222
    %v556 = vpop.f32.mrb[0].mxu0
    %v557 = vadd.f32 0.0, %v556
    %v558 = vpop.f32.mrb[0].mxu0
    %559 = vmatprep.mubr.f32.mxu0 0.0
    %560 = vmatmul.mubr.f32.gmra.mrb[0].mxu0 %v223
    %v561 = vpop.f32.mrb[0].mxu0
    %v562 = vadd.f32 0.0, %v561
    %v563 = vpop.f32.mrb[0].mxu0
    %564 = vmatprep.mubr.f32.mxu0 0.0
    %565 = vmatmul.mubr.f32.gmra.mrb[0].mxu0 %v224
    %v566 = vpop.f32.mrb[0].mxu0
    %v567 = vadd.f32 0.0, %v566
    %v568 = vpop.f32.mrb[0].mxu0
    %569 = vmatprep.mubr.f32.mxu0 0.0
    %570 = vmatmul.mubr.f32.gmra.mrb[0].mxu0 %v225
    %v571 = vpop.f32.mrb[0].mxu0
    %v572 = vadd.f32 0.0, %v571
    %v573 = vpop.f32.mrb[0].mxu0
    %574 = vmatprep.mubr.f32.mxu0 0.0
    %575 = vmatmul.mubr.f32.gmra.mrb[0].mxu0 %v226
    %v576 = vpop.f32.mrb[0].mxu0
    %v577 = vadd.f32 0.0, %v576
    %v578 = vpop.f32.mrb[0].mxu0
    %579 = vmatprep.mubr.f32.mxu0 0.0
    %580 = vmatmul.mubr.f32.gmra.mrb[0].mxu0 %v227
    %v581 = vpop.f32.mrb[0].mxu0
    %v582 = vadd.f32 0.0, %v581
    %v583 = vpop.f32.mrb[0].mxu0
    %584 = vmatprep.mubr.f32.mxu0 0.0
    %585 = vmatmul.mubr.f32.gmra.mrb[0].mxu0 %v228
    %v586 = vpop.f32.mrb[0].mxu0
    %v587 = vadd.f32 0.0, %v586
    %v588 = vpop.f32.mrb[0].mxu0
    %589 = vmatprep.mubr.f32.mxu0 0.0
    %590 = vmatmul.mubr.f32.gmra.mrb[0].mxu0 %v229
    %v591 = vpop.f32.mrb[0].mxu0
    %v592 = vadd.f32 0.0, %v591
    %v593 = vpop.f32.mrb[0].mxu0
    %594 = vmatprep.mubr.f32.mxu0 0.0
    %595 = vmatmul.mubr.f32.gmra.mrb[0].mxu0 %v230
    %v596 = vpop.f32.mrb[0].mxu0
    %v597 = vadd.f32 0.0, %v596
    %v598 = vpop.f32.mrb[0].mxu0
    %599 = vmatprep.mubr.f32.mxu0 0.0
    %600 = vmatmul.mubr.f32.gmra.mrb[0].mxu0 %v231
    %v601 = vpop.f32.mrb[0].mxu0
    %v602 = vadd.f32 0.0, %v601
    %v603 = vpop.f32.mrb[0].mxu0
    %604 = vmatprep.mubr.f32.mxu0 0.0
    %605 = vmatmul.mubr.f32.gmra.mrb[0].mxu0 %v232
    %v606 = vpop.f32.mrb[0].mxu0
    %v607 = vadd.f32 0.0, %v606
    %v608 = vpop.f32.mrb[0].mxu0
    %609 = vmatprep.mubr.f32.mxu0 0.0
    %610 = vmatmul.mubr.f32.gmra.mrb[0].mxu0 %v233
    %v611 = vpop.f32.mrb[0].mxu0
    %v612 = vadd.f32 0.0, %v611
    %v613 = vpop.f32.mrb[0].mxu0
    %614 = vmatprep.mubr.f32.mxu0 0.0
    %615 = vmatmul.mubr.f32.gmra.mrb[0].mxu0 %v234
    %v616 = vpop.f32.mrb[0].mxu0
    %v617 = vadd.f32 0.0, %v616
    %v618 = vpop.f32.mrb[0].mxu0
    %619 = vmatprep.mubr.f32.mxu0 0.0
    %620 = vmatmul.mubr.f32.gmra.mrb[0].mxu0 %v235
    %v621 = vpop.f32.mrb[0].mxu0
    %v622 = vadd.f32 0.0, %v621
    %v623 = vpop.f32.mrb[0].mxu0
    %624 = vmatprep.mubr.f32.mxu0 0.0
    %625 = vmatmul.mubr.f32.gmra.mrb[0].mxu0 %v236
    %v626 = vpop.f32.mrb[0].mxu0
    %v627 = vadd.f32 0.0, %v626
    %v628 = vpop.f32.mrb[0].mxu0
    %629 = vmatprep.mubr.f32.mxu0 0.0
    %630 = vmatmul.mubr.f32.gmra.mrb[0].mxu0 %v237
    %v631 = vpop.f32.mrb[0].mxu0
    %v632 = vadd.f32 0.0, %v631
    %v633 = vpop.f32.mrb[0].mxu0
    %634 = vmatprep.mubr.f32.mxu0 0.0
    %635 = vmatmul.mubr.f32.gmra.mrb[0].mxu0 %v238
    %v636 = vpop.f32.mrb[0].mxu0
    %v637 = vadd.f32 0.0, %v636
    %v638 = vpop.f32.mrb[0].mxu0
    %639 = vdwg.mxu0
    %v640 = vadd.f32 %v111, %v322
    %v641 = vadd.f32 %v112, %v327
    %v642 = vadd.f32 %v113, %v332
    %v643 = vadd.f32 %v114, %v337
    %v644 = vadd.f32 %v115, %v342
    %v645 = vadd.f32 %v116, %v347
    %v646 = vadd.f32 %v117, %v352
    %v647 = vadd.f32 %v118, %v357
    %v648 = vadd.f32 %v119, %v362
    %v649 = vadd.f32 %v120, %v367
    %v650 = vadd.f32 %v121, %v372
    %v651 = vadd.f32 %v122, %v377
    %v652 = vadd.f32 %v123, %v382
    %v653 = vadd.f32 %v124, %v387
    %v654 = vadd.f32 %v125, %v392
    %v655 = vadd.f32 %v126, %v397
    %v656 = vadd.f32 %v127, %v402
    %v657 = vadd.f32 %v128, %v407
    %v658 = vadd.f32 %v129, %v412
    %v659 = vadd.f32 %v130, %v417
    %v660 = vadd.f32 %v131, %v422
    %v661 = vadd.f32 %v132, %v427
    %v662 = vadd.f32 %v133, %v432
    %v663 = vadd.f32 %v134, %v437
    %v664 = vadd.f32 %v135, %v442
    %v665 = vadd.f32 %v136, %v447
    %v666 = vadd.f32 %v137, %v452
    %v667 = vadd.f32 %v138, %v457
    %v668 = vadd.f32 %v139, %v462
    %v669 = vadd.f32 %v140, %v467
    %v670 = vadd.f32 %v141, %v472
    %v671 = vadd.f32 %v142, %v477
    %v672 = vadd.f32 %v143, %v482
    %v673 = vadd.f32 %v144, %v487
    %v674 = vadd.f32 %v145, %v492
    %v675 = vadd.f32 %v146, %v497
    %v676 = vadd.f32 %v147, %v502
    %v677 = vadd.f32 %v148, %v507
    %v678 = vadd.f32 %v149, %v512
    %v679 = vadd.f32 %v150, %v517
    %v680 = vadd.f32 %v151, %v522
    %v681 = vadd.f32 %v152, %v527
    %v682 = vadd.f32 %v153, %v532
    %v683 = vadd.f32 %v154, %v537
    %v684 = vadd.f32 %v155, %v542
    %v685 = vadd.f32 %v156, %v547
    %v686 = vadd.f32 %v157, %v552
    %v687 = vadd.f32 %v158, %v557
    %v688 = vadd.f32 %v159, %v562
    %v689 = vadd.f32 %v160, %v567
    %v690 = vadd.f32 %v161, %v572
    %v691 = vadd.f32 %v162, %v577
    %v692 = vadd.f32 %v163, %v582
    %v693 = vadd.f32 %v164, %v587
    %v694 = vadd.f32 %v165, %v592
    %v695 = vadd.f32 %v166, %v597
    %v696 = vadd.f32 %v167, %v602
    %v697 = vadd.f32 %v168, %v607
    %v698 = vadd.f32 %v169, %v612
    %v699 = vadd.f32 %v170, %v617
    %v700 = vadd.f32 %v171, %v622
    %v701 = vadd.f32 %v172, %v627
    %v702 = vadd.f32 %v173, %v632
    %v703 = vadd.f32 %v174, %v637
    %704 = vst [vmem:[#allocation2] sm:$0xff] %v640
    %705 = vst [vmem:[#allocation2 + $0x8] sm:$0xff] %v641
    %706 = vst [vmem:[#allocation2 + $0x10] sm:$0xff] %v642
    %707 = vst [vmem:[#allocation2 + $0x18] sm:$0xff] %v643
    %708 = vst [vmem:[#allocation2 + $0x20] sm:$0xff] %v644
    %709 = vst [vmem:[#allocation2 + $0x28] sm:$0xff] %v645
    %710 = vst [vmem:[#allocation2 + $0x30] sm:$0xff] %v646
    %711 = vst [vmem:[#allocation2 + $0x38] sm:$0xff] %v647
    %712 = vst [vmem:[#allocation2 + $0x40] sm:$0xff] %v648
    %713 = vst [vmem:[#allocation2 + $0x48] sm:$0xff] %v649
    %714 = vst [vmem:[#allocation2 + $0x50] sm:$0xff] %v650
    %715 = vst [vmem:[#allocation2 + $0x58] sm:$0xff] %v651
    %716 = vst [vmem:[#allocation2 + $0x60] sm:$0xff] %v652
    %717 = vst [vmem:[#allocation2 + $0x68] sm:$0xff] %v653
    %718 = vst [vmem:[#allocation2 + $0x70] sm:$0xff] %v654
    %719 = vst [vmem:[#allocation2 + $0x78] sm:$0xff] %v655
    %720 = vst [vmem:[#allocation2 + $0x80] sm:$0xff] %v656
    %721 = vst [vmem:[#allocation2 + $0x88] sm:$0xff] %v657
    %722 = vst [vmem:[#allocation2 + $0x90] sm:$0xff] %v658
    %723 = vst [vmem:[#allocation2 + $0x98] sm:$0xff] %v659
    %724 = vst [vmem:[#allocation2 + $0xa0] sm:$0xff] %v660
    %725 = vst [vmem:[#allocation2 + $0xa8] sm:$0xff] %v661
    %726 = vst [vmem:[#allocation2 + $0xb0] sm:$0xff] %v662
    %727 = vst [vmem:[#allocation2 + $0xb8] sm:$0xff] %v663
    %728 = vst [vmem:[#allocation2 + $0xc0] sm:$0xff] %v664
    %729 = vst [vmem:[#allocation2 + $0xc8] sm:$0xff] %v665
    %730 = vst [vmem:[#allocation2 + $0xd0] sm:$0xff] %v666
    %731 = vst [vmem:[#allocation2 + $0xd8] sm:$0xff] %v667
    %732 = vst [vmem:[#allocation2 + $0xe0] sm:$0xff] %v668
    %733 = vst [vmem:[#allocation2 + $0xe8] sm:$0xff] %v669
    %734 = vst [vmem:[#allocation2 + $0xf0] sm:$0xff] %v670
    %735 = vst [vmem:[#allocation2 + $0xf8] sm:$0xff] %v671
    %736 = vst [vmem:[#allocation2 + $0x100] sm:$0xff] %v672
    %737 = vst [vmem:[#allocation2 + $0x108] sm:$0xff] %v673
    %738 = vst [vmem:[#allocation2 + $0x110] sm:$0xff] %v674
    %739 = vst [vmem:[#allocation2 + $0x118] sm:$0xff] %v675
    %740 = vst [vmem:[#allocation2 + $0x120] sm:$0xff] %v676
    %741 = vst [vmem:[#allocation2 + $0x128] sm:$0xff] %v677
    %742 = vst [vmem:[#allocation2 + $0x130] sm:$0xff] %v678
    %743 = vst [vmem:[#allocation2 + $0x138] sm:$0xff] %v679
    %744 = vst [vmem:[#allocation2 + $0x140] sm:$0xff] %v680
    %745 = vst [vmem:[#allocation2 + $0x148] sm:$0xff] %v681
    %746 = vst [vmem:[#allocation2 + $0x150] sm:$0xff] %v682
    %747 = vst [vmem:[#allocation2 + $0x158] sm:$0xff] %v683
    %748 = vst [vmem:[#allocation2 + $0x160] sm:$0xff] %v684
    %749 = vst [vmem:[#allocation2 + $0x168] sm:$0xff] %v685
    %750 = vst [vmem:[#allocation2 + $0x170] sm:$0xff] %v686
    %751 = vst [vmem:[#allocation2 + $0x178] sm:$0xff] %v687
    %752 = vst [vmem:[#allocation2 + $0x180] sm:$0xff] %v688
    %753 = vst [vmem:[#allocation2 + $0x188] sm:$0xff] %v689
    %754 = vst [vmem:[#allocation2 + $0x190] sm:$0xff] %v690
    %755 = vst [vmem:[#allocation2 + $0x198] sm:$0xff] %v691
    %756 = vst [vmem:[#allocation2 + $0x1a0] sm:$0xff] %v692
    %757 = vst [vmem:[#allocation2 + $0x1a8] sm:$0xff] %v693
    %758 = vst [vmem:[#allocation2 + $0x1b0] sm:$0xff] %v694
    %759 = vst [vmem:[#allocation2 + $0x1b8] sm:$0xff] %v695
    %760 = vst [vmem:[#allocation2 + $0x1c0] sm:$0xff] %v696
    %761 = vst [vmem:[#allocation2 + $0x1c8] sm:$0xff] %v697
    %762 = vst [vmem:[#allocation2 + $0x1d0] sm:$0xff] %v698
    %763 = vst [vmem:[#allocation2 + $0x1d8] sm:$0xff] %v699
    %764 = vst [vmem:[#allocation2 + $0x1e0] sm:$0xff] %v700
    %765 = vst [vmem:[#allocation2 + $0x1e8] sm:$0xff] %v701
    %766 = vst [vmem:[#allocation2 + $0x1f0] sm:$0xff] %v702
    %767 = vst [vmem:[#allocation2 + $0x1f8] sm:$0xff] %v703
    // Predicated region
    $region22: #{tpu_custom_call.1} parent=1 // pred_check
      %p768 = pneg %p43
    $region23: #{tpu_custom_call.1} parent=1 // pred_check_branch
      %770 = sbr.rel (%p768) target = $region25
    $region24: #{tpu_custom_call.1} parent=1 // pred_region
      %v771 = vld [vmem:[#allocation2] sm:$0xff]
      %v772 = vld [vmem:[#allocation2 + $0x8] sm:$0xff]
      %v773 = vld [vmem:[#allocation2 + $0x10] sm:$0xff]
      %v774 = vld [vmem:[#allocation2 + $0x18] sm:$0xff]
      %v775 = vld [vmem:[#allocation2 + $0x20] sm:$0xff]
      %v776 = vld [vmem:[#allocation2 + $0x28] sm:$0xff]
      %v777 = vld [vmem:[#allocation2 + $0x30] sm:$0xff]
      %v778 = vld [vmem:[#allocation2 + $0x38] sm:$0xff]
      %v779 = vld [vmem:[#allocation2 + $0x40] sm:$0xff]
      %v780 = vld [vmem:[#allocation2 + $0x48] sm:$0xff]
      %v781 = vld [vmem:[#allocation2 + $0x50] sm:$0xff]
      %v782 = vld [vmem:[#allocation2 + $0x58] sm:$0xff]
      %v783 = vld [vmem:[#allocation2 + $0x60] sm:$0xff]
      %v784 = vld [vmem:[#allocation2 + $0x68] sm:$0xff]
      %v785 = vld [vmem:[#allocation2 + $0x70] sm:$0xff]
      %v786 = vld [vmem:[#allocation2 + $0x78] sm:$0xff]
      %v787 = vld [vmem:[#allocation2 + $0x80] sm:$0xff]
      %v788 = vld [vmem:[#allocation2 + $0x88] sm:$0xff]
      %v789 = vld [vmem:[#allocation2 + $0x90] sm:$0xff]
      %v790 = vld [vmem:[#allocation2 + $0x98] sm:$0xff]
      %v791 = vld [vmem:[#allocation2 + $0xa0] sm:$0xff]
      %v792 = vld [vmem:[#allocation2 + $0xa8] sm:$0xff]
      %v793 = vld [vmem:[#allocation2 + $0xb0] sm:$0xff]
      %v794 = vld [vmem:[#allocation2 + $0xb8] sm:$0xff]
      %v795 = vld [vmem:[#allocation2 + $0xc0] sm:$0xff]
      %v796 = vld [vmem:[#allocation2 + $0xc8] sm:$0xff]
      %v797 = vld [vmem:[#allocation2 + $0xd0] sm:$0xff]
      %v798 = vld [vmem:[#allocation2 + $0xd8] sm:$0xff]
      %v799 = vld [vmem:[#allocation2 + $0xe0] sm:$0xff]
      %v800 = vld [vmem:[#allocation2 + $0xe8] sm:$0xff]
      %v801 = vld [vmem:[#allocation2 + $0xf0] sm:$0xff]
      %v802 = vld [vmem:[#allocation2 + $0xf8] sm:$0xff]
      %v803 = vld [vmem:[#allocation2 + $0x100] sm:$0xff]
      %v804 = vld [vmem:[#allocation2 + $0x108] sm:$0xff]
      %v805 = vld [vmem:[#allocation2 + $0x110] sm:$0xff]
      %v806 = vld [vmem:[#allocation2 + $0x118] sm:$0xff]
      %v807 = vld [vmem:[#allocation2 + $0x120] sm:$0xff]
      %v808 = vld [vmem:[#allocation2 + $0x128] sm:$0xff]
      %v809 = vld [vmem:[#allocation2 + $0x130] sm:$0xff]
      %v810 = vld [vmem:[#allocation2 + $0x138] sm:$0xff]
      %v811 = vld [vmem:[#allocation2 + $0x140] sm:$0xff]
      %v812 = vld [vmem:[#allocation2 + $0x148] sm:$0xff]
      %v813 = vld [vmem:[#allocation2 + $0x150] sm:$0xff]
      %v814 = vld [vmem:[#allocation2 + $0x158] sm:$0xff]
      %v815 = vld [vmem:[#allocation2 + $0x160] sm:$0xff]
      %v816 = vld [vmem:[#allocation2 + $0x168] sm:$0xff]
      %v817 = vld [vmem:[#allocation2 + $0x170] sm:$0xff]
      %v818 = vld [vmem:[#allocation2 + $0x178] sm:$0xff]
      %v819 = vld [vmem:[#allocation2 + $0x180] sm:$0xff]
      %v820 = vld [vmem:[#allocation2 + $0x188] sm:$0xff]
      %v821 = vld [vmem:[#allocation2 + $0x190] sm:$0xff]
      %v822 = vld [vmem:[#allocation2 + $0x198] sm:$0xff]
      %v823 = vld [vmem:[#allocation2 + $0x1a0] sm:$0xff]
      %v824 = vld [vmem:[#allocation2 + $0x1a8] sm:$0xff]
      %v825 = vld [vmem:[#allocation2 + $0x1b0] sm:$0xff]
      %v826 = vld [vmem:[#allocation2 + $0x1b8] sm:$0xff]
      %v827 = vld [vmem:[#allocation2 + $0x1c0] sm:$0xff]
      %v828 = vld [vmem:[#allocation2 + $0x1c8] sm:$0xff]
      %v829 = vld [vmem:[#allocation2 + $0x1d0] sm:$0xff]
      %v830 = vld [vmem:[#allocation2 + $0x1d8] sm:$0xff]
      %v831 = vld [vmem:[#allocation2 + $0x1e0] sm:$0xff]
      %v832 = vld [vmem:[#allocation2 + $0x1e8] sm:$0xff]
      %v833 = vld [vmem:[#allocation2 + $0x1f0] sm:$0xff]
      %v834 = vld [vmem:[#allocation2 + $0x1f8] sm:$0xff]
      %v835 = vpack.c.bf16 %v772, %v771
      %v836 = vpack.c.bf16 %v774, %v773
      %v837 = vpack.c.bf16 %v776, %v775
      %v838 = vpack.c.bf16 %v778, %v777
      %v839 = vpack.c.bf16 %v780, %v779
      %v840 = vpack.c.bf16 %v782, %v781
      %v841 = vpack.c.bf16 %v784, %v783
      %v842 = vpack.c.bf16 %v786, %v785
      %v843 = vpack.c.bf16 %v788, %v787
      %v844 = vpack.c.bf16 %v790, %v789
      %v845 = vpack.c.bf16 %v792, %v791
      %v846 = vpack.c.bf16 %v794, %v793
      %v847 = vpack.c.bf16 %v796, %v795
      %v848 = vpack.c.bf16 %v798, %v797
      %v849 = vpack.c.bf16 %v800, %v799
      %v850 = vpack.c.bf16 %v802, %v801
      %v851 = vpack.c.bf16 %v804, %v803
      %v852 = vpack.c.bf16 %v806, %v805
      %v853 = vpack.c.bf16 %v808, %v807
      %v854 = vpack.c.bf16 %v810, %v809
      %v855 = vpack.c.bf16 %v812, %v811
      %v856 = vpack.c.bf16 %v814, %v813
      %v857 = vpack.c.bf16 %v816, %v815
      %v858 = vpack.c.bf16 %v818, %v817
      %v859 = vpack.c.bf16 %v820, %v819
      %v860 = vpack.c.bf16 %v822, %v821
      %v861 = vpack.c.bf16 %v824, %v823
      %v862 = vpack.c.bf16 %v826, %v825
      %v863 = vpack.c.bf16 %v828, %v827
      %v864 = vpack.c.bf16 %v830, %v829
      %v865 = vpack.c.bf16 %v832, %v831
      %v866 = vpack.c.bf16 %v834, %v833
      %v899 = vunpack.c.l.b16 %v835
      %v900 = vunpack.c.h.b16 %v835
      %v901 = vunpack.c.l.b16 %v836
      %v902 = vunpack.c.h.b16 %v836
      %v903 = vunpack.c.l.b16 %v837
      %v904 = vunpack.c.h.b16 %v837
      %v905 = vunpack.c.l.b16 %v838
      %v906 = vunpack.c.h.b16 %v838
      %v907 = vunpack.c.l.b16 %v839
      %v908 = vunpack.c.h.b16 %v839
      %v909 = vunpack.c.l.b16 %v840
      %v910 = vunpack.c.h.b16 %v840
      %v911 = vunpack.c.l.b16 %v841
      %v912 = vunpack.c.h.b16 %v841
      %v913 = vunpack.c.l.b16 %v842
      %v914 = vunpack.c.h.b16 %v842
      %v915 = vunpack.c.l.b16 %v843
      %v916 = vunpack.c.h.b16 %v843
      %v917 = vunpack.c.l.b16 %v844
      %v918 = vunpack.c.h.b16 %v844
      %v919 = vunpack.c.l.b16 %v845
      %v920 = vunpack.c.h.b16 %v845
      %v921 = vunpack.c.l.b16 %v846
      %v922 = vunpack.c.h.b16 %v846
      %v923 = vunpack.c.l.b16 %v847
      %v924 = vunpack.c.h.b16 %v847
      %v925 = vunpack.c.l.b16 %v848
      %v926 = vunpack.c.h.b16 %v848
      %v927 = vunpack.c.l.b16 %v849
      %v928 = vunpack.c.h.b16 %v849
      %v929 = vunpack.c.l.b16 %v850
      %v930 = vunpack.c.h.b16 %v850
      %v931 = vunpack.c.l.b16 %v851
      %v932 = vunpack.c.h.b16 %v851
      %v933 = vunpack.c.l.b16 %v852
      %v934 = vunpack.c.h.b16 %v852
      %v935 = vunpack.c.l.b16 %v853
      %v936 = vunpack.c.h.b16 %v853
      %v937 = vunpack.c.l.b16 %v854
      %v938 = vunpack.c.h.b16 %v854
      %v939 = vunpack.c.l.b16 %v855
      %v940 = vunpack.c.h.b16 %v855
      %v941 = vunpack.c.l.b16 %v856
      %v942 = vunpack.c.h.b16 %v856
      %v943 = vunpack.c.l.b16 %v857
      %v944 = vunpack.c.h.b16 %v857
      %v945 = vunpack.c.l.b16 %v858
      %v946 = vunpack.c.h.b16 %v858
      %v947 = vunpack.c.l.b16 %v859
      %v948 = vunpack.c.h.b16 %v859
      %v949 = vunpack.c.l.b16 %v860
      %v950 = vunpack.c.h.b16 %v860
      %v951 = vunpack.c.l.b16 %v861
      %v952 = vunpack.c.h.b16 %v861
      %v953 = vunpack.c.l.b16 %v862
      %v954 = vunpack.c.h.b16 %v862
      %v955 = vunpack.c.l.b16 %v863
      %v956 = vunpack.c.h.b16 %v863
      %v957 = vunpack.c.l.b16 %v864
      %v958 = vunpack.c.h.b16 %v864
      %v959 = vunpack.c.l.b16 %v865
      %v960 = vunpack.c.h.b16 %v865
      %v961 = vunpack.c.l.b16 %v866
      %v962 = vunpack.c.h.b16 %v866
      %v963 = vpack.c.b16 %v899, %v899
      %v964 = vpack.c.b16 %v900, %v900
      %v965 = vpack.c.b16 %v901, %v901
      %v966 = vpack.c.b16 %v902, %v902
      %v967 = vpack.c.b16 %v903, %v903
      %v968 = vpack.c.b16 %v904, %v904
      %v969 = vpack.c.b16 %v905, %v905
      %v970 = vpack.c.b16 %v906, %v906
      %v971 = vpack.c.b16 %v907, %v907
      %v972 = vpack.c.b16 %v908, %v908
      %v973 = vpack.c.b16 %v909, %v909
      %v974 = vpack.c.b16 %v910, %v910
      %v975 = vpack.c.b16 %v911, %v911
      %v976 = vpack.c.b16 %v912, %v912
      %v977 = vpack.c.b16 %v913, %v913
      %v978 = vpack.c.b16 %v914, %v914
      %v979 = vpack.c.b16 %v915, %v915
      %v980 = vpack.c.b16 %v916, %v916
      %v981 = vpack.c.b16 %v917, %v917
      %v982 = vpack.c.b16 %v918, %v918
      %v983 = vpack.c.b16 %v919, %v919
      %v984 = vpack.c.b16 %v920, %v920
      %v985 = vpack.c.b16 %v921, %v921
      %v986 = vpack.c.b16 %v922, %v922
      %v987 = vpack.c.b16 %v923, %v923
      %v988 = vpack.c.b16 %v924, %v924
      %v989 = vpack.c.b16 %v925, %v925
      %v990 = vpack.c.b16 %v926, %v926
      %v991 = vpack.c.b16 %v927, %v927
      %v992 = vpack.c.b16 %v928, %v928
      %v993 = vpack.c.b16 %v929, %v929
      %v994 = vpack.c.b16 %v930, %v930
      %v995 = vpack.c.b16 %v931, %v931
      %v996 = vpack.c.b16 %v932, %v932
      %v997 = vpack.c.b16 %v933, %v933
      %v998 = vpack.c.b16 %v934, %v934
      %v999 = vpack.c.b16 %v935, %v935
      %v1000 = vpack.c.b16 %v936, %v936
      %v1001 = vpack.c.b16 %v937, %v937
      %v1002 = vpack.c.b16 %v938, %v938
      %v1003 = vpack.c.b16 %v939, %v939
      %v1004 = vpack.c.b16 %v940, %v940
      %v1005 = vpack.c.b16 %v941, %v941
      %v1006 = vpack.c.b16 %v942, %v942
      %v1007 = vpack.c.b16 %v943, %v943
      %v1008 = vpack.c.b16 %v944, %v944
      %v1009 = vpack.c.b16 %v945, %v945
      %v1010 = vpack.c.b16 %v946, %v946
      %v1011 = vpack.c.b16 %v947, %v947
      %v1012 = vpack.c.b16 %v948, %v948
      %v1013 = vpack.c.b16 %v949, %v949
      %v1014 = vpack.c.b16 %v950, %v950
      %v1015 = vpack.c.b16 %v951, %v951
      %v1016 = vpack.c.b16 %v952, %v952
      %v1017 = vpack.c.b16 %v953, %v953
      %v1018 = vpack.c.b16 %v954, %v954
      %v1019 = vpack.c.b16 %v955, %v955
      %v1020 = vpack.c.b16 %v956, %v956
      %v1021 = vpack.c.b16 %v957, %v957
      %v1022 = vpack.c.b16 %v958, %v958
      %v1023 = vpack.c.b16 %v959, %v959
      %v1024 = vpack.c.b16 %v960, %v960
      %v1025 = vpack.c.b16 %v961, %v961
      %v1026 = vpack.c.b16 %v962, %v962
      %1091 = vst [vmem:[#allocation8] sm:$0xf] %v963
      %1092 = vst [vmem:[#allocation8 + $0x4] sm:$0xf] %v964
      %1093 = vst [vmem:[#allocation8 + $0x8] sm:$0xf] %v965
      %1094 = vst [vmem:[#allocation8 + $0xc] sm:$0xf] %v966
      %1095 = vst [vmem:[#allocation8 + $0x10] sm:$0xf] %v967
      %1096 = vst [vmem:[#allocation8 + $0x14] sm:$0xf] %v968
      %1097 = vst [vmem:[#allocation8 + $0x18] sm:$0xf] %v969
      %1098 = vst [vmem:[#allocation8 + $0x1c] sm:$0xf] %v970
      %1099 = vst [vmem:[#allocation8 + $0x20] sm:$0xf] %v971
      %1100 = vst [vmem:[#allocation8 + $0x24] sm:$0xf] %v972
      %1101 = vst [vmem:[#allocation8 + $0x28] sm:$0xf] %v973
      %1102 = vst [vmem:[#allocation8 + $0x2c] sm:$0xf] %v974
      %1103 = vst [vmem:[#allocation8 + $0x30] sm:$0xf] %v975
      %1104 = vst [vmem:[#allocation8 + $0x34] sm:$0xf] %v976
      %1105 = vst [vmem:[#allocation8 + $0x38] sm:$0xf] %v977
      %1106 = vst [vmem:[#allocation8 + $0x3c] sm:$0xf] %v978
      %1107 = vst [vmem:[#allocation8 + $0x40] sm:$0xf] %v979
      %1108 = vst [vmem:[#allocation8 + $0x44] sm:$0xf] %v980
      %1109 = vst [vmem:[#allocation8 + $0x48] sm:$0xf] %v981
      %1110 = vst [vmem:[#allocation8 + $0x4c] sm:$0xf] %v982
      %1111 = vst [vmem:[#allocation8 + $0x50] sm:$0xf] %v983
      %1112 = vst [vmem:[#allocation8 + $0x54] sm:$0xf] %v984
      %1113 = vst [vmem:[#allocation8 + $0x58] sm:$0xf] %v985
      %1114 = vst [vmem:[#allocation8 + $0x5c] sm:$0xf] %v986
      %1115 = vst [vmem:[#allocation8 + $0x60] sm:$0xf] %v987
      %1116 = vst [vmem:[#allocation8 + $0x64] sm:$0xf] %v988
      %1117 = vst [vmem:[#allocation8 + $0x68] sm:$0xf] %v989
      %1118 = vst [vmem:[#allocation8 + $0x6c] sm:$0xf] %v990
      %1119 = vst [vmem:[#allocation8 + $0x70] sm:$0xf] %v991
      %1120 = vst [vmem:[#allocation8 + $0x74] sm:$0xf] %v992
      %1121 = vst [vmem:[#allocation8 + $0x78] sm:$0xf] %v993
      %1122 = vst [vmem:[#allocation8 + $0x7c] sm:$0xf] %v994
      %1123 = vst [vmem:[#allocation8 + $0x80] sm:$0xf] %v995
      %1124 = vst [vmem:[#allocation8 + $0x84] sm:$0xf] %v996
      %1125 = vst [vmem:[#allocation8 + $0x88] sm:$0xf] %v997
      %1126 = vst [vmem:[#allocation8 + $0x8c] sm:$0xf] %v998
      %1127 = vst [vmem:[#allocation8 + $0x90] sm:$0xf] %v999
      %1128 = vst [vmem:[#allocation8 + $0x94] sm:$0xf] %v1000
      %1129 = vst [vmem:[#allocation8 + $0x98] sm:$0xf] %v1001
      %1130 = vst [vmem:[#allocation8 + $0x9c] sm:$0xf] %v1002
      %1131 = vst [vmem:[#allocation8 + $0xa0] sm:$0xf] %v1003
      %1132 = vst [vmem:[#allocation8 + $0xa4] sm:$0xf] %v1004
      %1133 = vst [vmem:[#allocation8 + $0xa8] sm:$0xf] %v1005
      %1134 = vst [vmem:[#allocation8 + $0xac] sm:$0xf] %v1006
      %1135 = vst [vmem:[#allocation8 + $0xb0] sm:$0xf] %v1007
      %1136 = vst [vmem:[#allocation8 + $0xb4] sm:$0xf] %v1008
      %1137 = vst [vmem:[#allocation8 + $0xb8] sm:$0xf] %v1009
      %1138 = vst [vmem:[#allocation8 + $0xbc] sm:$0xf] %v1010
      %1139 = vst [vmem:[#allocation8 + $0xc0] sm:$0xf] %v1011
      %1140 = vst [vmem:[#allocation8 + $0xc4] sm:$0xf] %v1012
      %1141 = vst [vmem:[#allocation8 + $0xc8] sm:$0xf] %v1013
      %1142 = vst [vmem:[#allocation8 + $0xcc] sm:$0xf] %v1014
      %1143 = vst [vmem:[#allocation8 + $0xd0] sm:$0xf] %v1015
      %1144 = vst [vmem:[#allocation8 + $0xd4] sm:$0xf] %v1016
      %1145 = vst [vmem:[#allocation8 + $0xd8] sm:$0xf] %v1017
      %1146 = vst [vmem:[#allocation8 + $0xdc] sm:$0xf] %v1018
      %1147 = vst [vmem:[#allocation8 + $0xe0] sm:$0xf] %v1019
      %1148 = vst [vmem:[#allocation8 + $0xe4] sm:$0xf] %v1020
      %1149 = vst [vmem:[#allocation8 + $0xe8] sm:$0xf] %v1021
      %1150 = vst [vmem:[#allocation8 + $0xec] sm:$0xf] %v1022
      %1151 = vst [vmem:[#allocation8 + $0xf0] sm:$0xf] %v1023
      %1152 = vst [vmem:[#allocation8 + $0xf4] sm:$0xf] %v1024
      %1153 = vst [vmem:[#allocation8 + $0xf8] sm:$0xf] %v1025
      %1154 = vst [vmem:[#allocation8 + $0xfc] sm:$0xf] %v1026
      %v1155 = vadd.f32 %v771, %v772
      %v1156 = vadd.f32 %v1155, %v773
      %v1157 = vadd.f32 %v1156, %v774
      %v1158 = vadd.f32 %v1157, %v775
      %v1159 = vadd.f32 %v1158, %v776
      %v1160 = vadd.f32 %v1159, %v777
      %v1161 = vadd.f32 %v1160, %v778
      %v1162 = vadd.f32 %v1161, %v779
      %v1163 = vadd.f32 %v1162, %v780
      %v1164 = vadd.f32 %v1163, %v781
      %v1165 = vadd.f32 %v1164, %v782
      %v1166 = vadd.f32 %v1165, %v783
      %v1167 = vadd.f32 %v1166, %v784
      %v1168 = vadd.f32 %v1167, %v785
      %v1169 = vadd.f32 %v1168, %v786
      %v1170 = vadd.f32 %v1169, %v787
      %v1171 = vadd.f32 %v1170, %v788
      %v1172 = vadd.f32 %v1171, %v789
      %v1173 = vadd.f32 %v1172, %v790
      %v1174 = vadd.f32 %v1173, %v791
      %v1175 = vadd.f32 %v1174, %v792
      %v1176 = vadd.f32 %v1175, %v793
      %v1177 = vadd.f32 %v1176, %v794
      %v1178 = vadd.f32 %v1177, %v795
      %v1179 = vadd.f32 %v1178, %v796
      %v1180 = vadd.f32 %v1179, %v797
      %v1181 = vadd.f32 %v1180, %v798
      %v1182 = vadd.f32 %v1181, %v799
      %v1183 = vadd.f32 %v1182, %v800
      %v1184 = vadd.f32 %v1183, %v801
      %v1185 = vadd.f32 %v1184, %v802
      %v1186 = vadd.f32 %v1185, %v803
      %v1187 = vadd.f32 %v1186, %v804
      %v1188 = vadd.f32 %v1187, %v805
      %v1189 = vadd.f32 %v1188, %v806
      %v1190 = vadd.f32 %v1189, %v807
      %v1191 = vadd.f32 %v1190, %v808
      %v1192 = vadd.f32 %v1191, %v809
      %v1193 = vadd.f32 %v1192, %v810
      %v1194 = vadd.f32 %v1193, %v811
      %v1195 = vadd.f32 %v1194, %v812
      %v1196 = vadd.f32 %v1195, %v813
      %v1197 = vadd.f32 %v1196, %v814
      %v1198 = vadd.f32 %v1197, %v815
      %v1199 = vadd.f32 %v1198, %v816
      %v1200 = vadd.f32 %v1199, %v817
      %v1201 = vadd.f32 %v1200, %v818
      %v1202 = vadd.f32 %v1201, %v819
      %v1203 = vadd.f32 %v1202, %v820
      %v1204 = vadd.f32 %v1203, %v821
      %v1205 = vadd.f32 %v1204, %v822
      %v1206 = vadd.f32 %v1205, %v823
      %v1207 = vadd.f32 %v1206, %v824
      %v1208 = vadd.f32 %v1207, %v825
      %v1209 = vadd.f32 %v1208, %v826
      %v1210 = vadd.f32 %v1209, %v827
      %v1211 = vadd.f32 %v1210, %v828
      %v1212 = vadd.f32 %v1211, %v829
      %v1213 = vadd.f32 %v1212, %v830
      %v1214 = vadd.f32 %v1213, %v831
      %v1215 = vadd.f32 %v1214, %v832
      %v1216 = vadd.f32 %v1215, %v833
      %v1217 = vadd.f32 %v1216, %v834
      %v1218 = vrot.slane %v1217, 4
      %v1219 = vadd.f32 %v1217, %v1218
      %v1220 = vrot.slane %v1219, 2
      %v1221 = vadd.f32 %v1219, %v1220
      %v1222 = vrot.slane %v1221, 1
      %v1223 = vadd.f32 %v1221, %v1222
      %1224 = vst [vmem:[#allocation9] sm:$0x1] %v1223
      %v1225 = vmul.f32 %v771, %v771
      %v1226 = vmul.f32 %v772, %v772
      %v1227 = vmul.f32 %v773, %v773
      %v1228 = vmul.f32 %v774, %v774
      %v1229 = vmul.f32 %v775, %v775
      %v1230 = vmul.f32 %v776, %v776
      %v1231 = vmul.f32 %v777, %v777
      %v1232 = vmul.f32 %v778, %v778
      %v1233 = vmul.f32 %v779, %v779
      %v1234 = vmul.f32 %v780, %v780
      %v1235 = vmul.f32 %v781, %v781
      %v1236 = vmul.f32 %v782, %v782
      %v1237 = vmul.f32 %v783, %v783
      %v1238 = vmul.f32 %v784, %v784
      %v1239 = vmul.f32 %v785, %v785
      %v1240 = vmul.f32 %v786, %v786
      %v1241 = vmul.f32 %v787, %v787
      %v1242 = vmul.f32 %v788, %v788
      %v1243 = vmul.f32 %v789, %v789
      %v1244 = vmul.f32 %v790, %v790
      %v1245 = vmul.f32 %v791, %v791
      %v1246 = vmul.f32 %v792, %v792
      %v1247 = vmul.f32 %v793, %v793
      %v1248 = vmul.f32 %v794, %v794
      %v1249 = vmul.f32 %v795, %v795
      %v1250 = vmul.f32 %v796, %v796
      %v1251 = vmul.f32 %v797, %v797
      %v1252 = vmul.f32 %v798, %v798
      %v1253 = vmul.f32 %v799, %v799
      %v1254 = vmul.f32 %v800, %v800
      %v1255 = vmul.f32 %v801, %v801
      %v1256 = vmul.f32 %v802, %v802
      %v1257 = vmul.f32 %v803, %v803
      %v1258 = vmul.f32 %v804, %v804
      %v1259 = vmul.f32 %v805, %v805
      %v1260 = vmul.f32 %v806, %v806
      %v1261 = vmul.f32 %v807, %v807
      %v1262 = vmul.f32 %v808, %v808
      %v1263 = vmul.f32 %v809, %v809
      %v1264 = vmul.f32 %v810, %v810
      %v1265 = vmul.f32 %v811, %v811
      %v1266 = vmul.f32 %v812, %v812
      %v1267 = vmul.f32 %v813, %v813
      %v1268 = vmul.f32 %v814, %v814
      %v1269 = vmul.f32 %v815, %v815
      %v1270 = vmul.f32 %v816, %v816
      %v1271 = vmul.f32 %v817, %v817
      %v1272 = vmul.f32 %v818, %v818
      %v1273 = vmul.f32 %v819, %v819
      %v1274 = vmul.f32 %v820, %v820
      %v1275 = vmul.f32 %v821, %v821
      %v1276 = vmul.f32 %v822, %v822
      %v1277 = vmul.f32 %v823, %v823
      %v1278 = vmul.f32 %v824, %v824
      %v1279 = vmul.f32 %v825, %v825
      %v1280 = vmul.f32 %v826, %v826
      %v1281 = vmul.f32 %v827, %v827
      %v1282 = vmul.f32 %v828, %v828
      %v1283 = vmul.f32 %v829, %v829
      %v1284 = vmul.f32 %v830, %v830
      %v1285 = vmul.f32 %v831, %v831
      %v1286 = vmul.f32 %v832, %v832
      %v1287 = vmul.f32 %v833, %v833
      %v1288 = vmul.f32 %v834, %v834
      %v1289 = vadd.f32 %v1225, %v1226
      %v1290 = vadd.f32 %v1289, %v1227
      %v1291 = vadd.f32 %v1290, %v1228
      %v1292 = vadd.f32 %v1291, %v1229
      %v1293 = vadd.f32 %v1292, %v1230
      %v1294 = vadd.f32 %v1293, %v1231
      %v1295 = vadd.f32 %v1294, %v1232
      %v1296 = vadd.f32 %v1295, %v1233
      %v1297 = vadd.f32 %v1296, %v1234
      %v1298 = vadd.f32 %v1297, %v1235
      %v1299 = vadd.f32 %v1298, %v1236
      %v1300 = vadd.f32 %v1299, %v1237
      %v1301 = vadd.f32 %v1300, %v1238
      %v1302 = vadd.f32 %v1301, %v1239
      %v1303 = vadd.f32 %v1302, %v1240
      %v1304 = vadd.f32 %v1303, %v1241
      %v1305 = vadd.f32 %v1304, %v1242
      %v1306 = vadd.f32 %v1305, %v1243
      %v1307 = vadd.f32 %v1306, %v1244
      %v1308 = vadd.f32 %v1307, %v1245
      %v1309 = vadd.f32 %v1308, %v1246
      %v1310 = vadd.f32 %v1309, %v1247
      %v1311 = vadd.f32 %v1310, %v1248
      %v1312 = vadd.f32 %v1311, %v1249
      %v1313 = vadd.f32 %v1312, %v1250
      %v1314 = vadd.f32 %v1313, %v1251
      %v1315 = vadd.f32 %v1314, %v1252
      %v1316 = vadd.f32 %v1315, %v1253
      %v1317 = vadd.f32 %v1316, %v1254
      %v1318 = vadd.f32 %v1317, %v1255
      %v1319 = vadd.f32 %v1318, %v1256
      %v1320 = vadd.f32 %v1319, %v1257
      %v1321 = vadd.f32 %v1320, %v1258
      %v1322 = vadd.f32 %v1321, %v1259
      %v1323 = vadd.f32 %v1322, %v1260
      %v1324 = vadd.f32 %v1323, %v1261
      %v1325 = vadd.f32 %v1324, %v1262
      %v1326 = vadd.f32 %v1325, %v1263
      %v1327 = vadd.f32 %v1326, %v1264
      %v1328 = vadd.f32 %v1327, %v1265
      %v1329 = vadd.f32 %v1328, %v1266
      %v1330 = vadd.f32 %v1329, %v1267
      %v1331 = vadd.f32 %v1330, %v1268
      %v1332 = vadd.f32 %v1331, %v1269
      %v1333 = vadd.f32 %v1332, %v1270
      %v1334 = vadd.f32 %v1333, %v1271
      %v1335 = vadd.f32 %v1334, %v1272
      %v1336 = vadd.f32 %v1335, %v1273
      %v1337 = vadd.f32 %v1336, %v1274
      %v1338 = vadd.f32 %v1337, %v1275
      %v1339 = vadd.f32 %v1338, %v1276
      %v1340 = vadd.f32 %v1339, %v1277
      %v1341 = vadd.f32 %v1340, %v1278
      %v1342 = vadd.f32 %v1341, %v1279
      %v1343 = vadd.f32 %v1342, %v1280
      %v1344 = vadd.f32 %v1343, %v1281
      %v1345 = vadd.f32 %v1344, %v1282
      %v1346 = vadd.f32 %v1345, %v1283
      %v1347 = vadd.f32 %v1346, %v1284
      %v1348 = vadd.f32 %v1347, %v1285
      %v1349 = vadd.f32 %v1348, %v1286
      %v1350 = vadd.f32 %v1349, %v1287
      %v1351 = vadd.f32 %v1350, %v1288
      %v1352 = vrot.slane %v1351, 4
      %v1353 = vadd.f32 %v1351, %v1352
      %v1354 = vrot.slane %v1353, 2
      %v1355 = vadd.f32 %v1353, %v1354
      %v1356 = vrot.slane %v1355, 1
      %v1357 = vadd.f32 %v1355, %v1356
      %1358 = vst [vmem:[#allocation9 + $0x1] sm:$0x1] %v1357
    $region25: #{tpu_custom_call.1} parent=1 // pred_fallthru
      _
    // Predicated region
    $region26: #{tpu_custom_call.1} parent=1 // pred_check
      _
    $region27: #{tpu_custom_call.1} parent=1 // pred_check_branch
      %1360 = sbr.rel (0) target = $region29
    $region28: #{tpu_custom_call.1} parent=1 // pred_region
      %s1362 = ssub.s32 4096, 4096
      %1363 = vsyncadd [#allocation5], %s1362
      %s1364 = sshll.u32 [#allocation8], 4
      %s1365 = int_to_ptr.vmem [resolvable:$true] %s1364
      %1370 = dma.vmem_to_hbm [thread:$0]  %s1365, 4096, %s2, [#allocation5], 64, 64, 4
    $region29: #{tpu_custom_call.1} parent=1 // pred_fallthru
      _
    // Predicated region
    $region30: #{tpu_custom_call.1} parent=1 // pred_check
      _
    $region31: #{tpu_custom_call.1} parent=1 // pred_check_branch
      %1372 = sbr.rel (0) target = $region33
    $region32: #{tpu_custom_call.1} parent=1 // pred_region
      %s1374 = ssub.s32 32, 32
      %1375 = vsyncadd [#allocation10], %s1374
      %s1377 = sshll.u32 [#allocation9], 4
      %s1378 = int_to_ptr.vmem [resolvable:$true] %s1377
      %1380 = dma.vmem_to_hbm [thread:$0]  %s1378, 32, %s3, [#allocation10]
    $region33: #{tpu_custom_call.1} parent=1 // pred_fallthru
      _
    // Predicated region
    $region34: #{tpu_custom_call.1} parent=1 // pred_check
      _
    $region35: #{tpu_custom_call.1} parent=1 // pred_check_branch
      %1382 = sbr.rel (0) target = $region37
    $region36: #{tpu_custom_call.1} parent=1 // pred_region
      %1383 = dma.done [#allocation5], 4096
    $region37: #{tpu_custom_call.1} parent=1 // pred_fallthru
      _
    // Predicated region
    $region38: #{tpu_custom_call.1} parent=1 // pred_check
      _
    $region39: #{tpu_custom_call.1} parent=1 // pred_check_branch
      %1385 = sbr.rel (0) target = $region41
    $region40: #{tpu_custom_call.1} parent=1 // pred_region
      %1386 = dma.done [#allocation10], 32
    $region41: #{tpu_custom_call.1} parent=1 // pred_fallthru
      _
    %1387 = vsyncpa [#allocation4], 1
    %1388 = vsyncpa [#allocation7], 1
    %1389 = vsyncpa [#allocation5], 1
    %1390 = vsyncpa [#allocation10], 1

</llo_original>
